<compile_context>
chip_gen: v6e
topology: v6e:2x2x1
jax: 0.10.0
libtpu: 0.0.40
codegen_flags: <defaults>
</compile_context>

<pallas_src>
import jax
import jax.numpy as jnp
from jax.experimental import pallas as pl
from jax.experimental.pallas import tpu as pltpu

HP = 128  # hidden width padded to one full 128-lane vector register


def _round_up(v, m):
    return ((v + m - 1) // m) * m


# ---------------------------------------------------------------------------
# Host-side weight packing: one [R, 128] f32 slab, 8-row-aligned blocks.
# ---------------------------------------------------------------------------
def _pack_weights(p, node_in, edge_in, hidden, num_classes):
    assert hidden <= HP, "hidden_channels must be <= 128 for this packing"
    assert num_classes <= HP, "num_classes must be <= 128 for this packing"
    assert node_in <= HP and edge_in >= 1
    assert p["l1"]["wm1"].shape == (2 * node_in + edge_in, HP)
    assert p["l2"]["wm1"].shape == (2 * hidden + edge_in, HP)
    assert p["wr1"].shape == (hidden, HP) and p["wr2"].shape == (HP, num_classes)

    def padded(w, rows):
        assert w.shape[0] <= rows and w.shape[1] <= 128, "weight block overflow"
        out = jnp.zeros((rows, 128), jnp.float32)
        return out.at[: w.shape[0], : w.shape[1]].set(w)

    items = []

    def add(name, arr, rows=None):
        rows = arr.shape[0] if rows is None else rows
        items.append((name, padded(arr, rows)))

    def add_layer(tag, lp, fin, fin_pad):
        wm1, wu = lp["wm1"], lp["wu"]          # message Linear1 / update Linear
        add(tag + "_wmi", wm1[:fin], fin_pad)           # x_i rows
        add(tag + "_wmj", wm1[fin:2 * fin], fin_pad)    # x_j rows
        add(tag + "_wme", wm1[2 * fin:])                # edge_attr rows
        add(tag + "_bm1", lp["bm1"][None, :])
        add(tag + "_wm2", lp["wm2"])                    # [128, hidden] -> cols padded
        add(tag + "_bm2", lp["bm2"][None, :])
        add(tag + "_wux", wu[:fin], fin_pad)            # x rows of update Linear
        add(tag + "_wua", wu[fin:], HP)                 # aggr rows of update Linear
        add(tag + "_bu", lp["bu"][None, :])

    add_layer("l1", p["l1"], node_in, node_in)  # layer-1 node features stay at width node_in
    add_layer("l2", p["l2"], hidden, HP)        # layer-2 node features live in padded HP lanes
    add("r_w1", p["wr1"], HP)
    add("r_b1", p["br1"][None, :])
    add("r_w2", p["wr2"])                       # [128, C] -> cols padded to 128
    add("r_b2", p["br2"][None, :])

    offsets, chunks, cur = {}, [], 0
    for name, arr in items:
        offsets[name] = (cur, arr.shape[0])
        chunks.append(arr)
        pad = (-arr.shape[0]) % 8               # keep every block 8-row aligned
        if pad:
            chunks.append(jnp.zeros((pad, 128), jnp.float32))
        cur += arr.shape[0] + pad
    return jnp.concatenate(chunks, axis=0), offsets


# ---------------------------------------------------------------------------
# Fused kernel: gather -> message MLP -> scatter-add -> update MLP (x2 layers)
#               -> graph sum-pool -> readout MLP, all on the MXU/VPU.
# ---------------------------------------------------------------------------
def _make_kernel(offsets, edge_in):
    f32 = jnp.float32

    def kernel(idx_ref, dsti_ref, bidx_ref, x_ref, ea_ref, w_ref, out_ref):
        def W(name):                      # static slice into the packed weight slab
            start, rows = offsets[name]
            return w_ref[start:start + rows, :]

        two_e = idx_ref.shape[0]
        E = two_e // 2                    # padded edge count (multiple of 8)
        N = x_ref.shape[0]                # padded node count (multiple of 8)
        Gp = out_ref.shape[0]             # padded graph count (multiple of 8)

        # One-hot operators built on-chip (VPU compare against an iota) from
        # int32 index vectors; sentinel indices (>= N / >= Gp) never match, so
        # padded edges/nodes contribute exactly zero.
        node_iota = jax.lax.broadcasted_iota(jnp.int32, (two_e, N), 1)
        edge_oh = (node_iota == idx_ref[...]).astype(f32)   # rows [:E]=target i, [E:]=source j
        dst_oh = edge_oh[:E]                                 # [E, N]
        src_oh = edge_oh[E:]                                 # [E, N]
        # Transposed target one-hot built directly -> scatter-add is a plain
        # jnp.dot (no XLU transpose from contracting lhs dim 0).
        dst_ohT = (jax.lax.broadcasted_iota(jnp.int32, (N, E), 0)
                   == dsti_ref[...]).astype(f32)             # [N, E]

        ea = ea_ref[...]

        def edge_term(tag):
            wme = W(tag + "_wme")                            # [edge_in, 128]
            if edge_in == 1:
                return ea * wme                              # [E,1]*[1,128] on the VPU
            return jnp.dot(ea, wme, preferred_element_type=f32)

        # -------------------- layer 1 (narrow node features) ----------------
        x_in = x_ref[...]                                    # [N, F1]
        gathered = jnp.dot(edge_oh, x_in, preferred_element_type=f32)   # [2E, F1]
        x_i, x_j = gathered[:E], gathered[E:]
        h = (jnp.dot(x_i, W("l1_wmi"), preferred_element_type=f32)
             + jnp.dot(x_j, W("l1_wmj"), preferred_element_type=f32)
             + edge_term("l1") + W("l1_bm1"))
        h = jnp.maximum(h, 0.0)
        msg = jnp.dot(h, W("l1_wm2"), preferred_element_type=f32) + W("l1_bm2")
        aggr = jnp.dot(dst_ohT, msg, preferred_element_type=f32)        # [N, 128]
        x1 = jnp.maximum(
            jnp.dot(x_in, W("l1_wux"), preferred_element_type=f32)
            + jnp.dot(aggr, W("l1_wua"), preferred_element_type=f32)
            + W("l1_bu"), 0.0)                                          # [N, 128]

        # ---------- layer 2 (projections hoisted to node granularity) -------
        p_i = jnp.dot(x1, W("l2_wmi"), preferred_element_type=f32)      # [N, 128]
        p_j = jnp.dot(x1, W("l2_wmj"), preferred_element_type=f32)      # [N, 128]
        h = (jnp.dot(dst_oh, p_i, preferred_element_type=f32)
             + jnp.dot(src_oh, p_j, preferred_element_type=f32)
             + edge_term("l2") + W("l2_bm1"))
        h = jnp.maximum(h, 0.0)
        msg = jnp.dot(h, W("l2_wm2"), preferred_element_type=f32) + W("l2_bm2")
        aggr = jnp.dot(dst_ohT, msg, preferred_element_type=f32)        # [N, 128]
        x2 = jnp.maximum(
            jnp.dot(x1, W("l2_wux"), preferred_element_type=f32)
            + jnp.dot(aggr, W("l2_wua"), preferred_element_type=f32)
            + W("l2_bu"), 0.0)                                          # [N, 128]

        # ---------------- graph sum-pool + readout MLP ----------------------
        pool_ohT = (jax.lax.broadcasted_iota(jnp.int32, (Gp, N), 0)
                    == bidx_ref[...]).astype(f32)                       # [Gp, N]
        g = jnp.dot(pool_ohT, x2, preferred_element_type=f32)           # [Gp, 128]
        r = jnp.maximum(
            jnp.dot(g, W("r_w1"), preferred_element_type=f32) + W("r_b1"), 0.0)
        logits = jnp.dot(r, W("r_w2"), preferred_element_type=f32) + W("r_b2")
        out_ref[...] = logits      # lane-dense full-tile store; host slices [:G, :C]

    return kernel


def mpnn_forward(x, edge_index, edge_attr, batch, params, num_graphs):
    N, node_in = x.shape
    E, edge_in = edge_attr.shape
    hidden = params["l1"]["wm2"].shape[1]
    num_classes = params["wr2"].shape[1]

    slab, offsets = _pack_weights(params, node_in, edge_in, hidden, num_classes)

    # Sublane-aligned padding: sentinel indices (N_pad / G_pad) never match the
    # in-kernel iota, so padded rows contribute exactly zero.
    N_pad = max(_round_up(N, 8), 8)
    E_pad = max(_round_up(E, 8), 8)
    G_pad = max(_round_up(num_graphs, 8), 8)

    x_p = jnp.zeros((N_pad, node_in), jnp.float32).at[:N].set(x.astype(jnp.float32))
    ea_p = jnp.zeros((E_pad, edge_in), jnp.float32).at[:E].set(edge_attr.astype(jnp.float32))

    dst = jnp.full((E_pad,), N_pad, jnp.int32).at[:E].set(edge_index[1].astype(jnp.int32))
    src = jnp.full((E_pad,), N_pad, jnp.int32).at[:E].set(edge_index[0].astype(jnp.int32))
    idx = jnp.concatenate([dst, src])[:, None]      # [2E_pad, 1]: target rows then source rows
    dsti = dst[None, :]                             # [1, E_pad] for the transposed scatter one-hot
    bidx = jnp.full((N_pad,), G_pad, jnp.int32).at[:N].set(batch.astype(jnp.int32))[None, :]

    kernel = _make_kernel(offsets, edge_in)
    vmem = pl.BlockSpec(memory_space=pltpu.MemorySpace.VMEM)
    # Gridless single-block kernel: fine at toy size (everything fits one VMEM block).
    # TODO(synk): for larger graphs add a grid (edge-tiled message MLP with a VMEM
    # aggr accumulator, node-tiled update/gather; weight slab single-buffered via a
    # constant index_map) so v7x's second TensorCore is used, and switch the gather
    # to a scalar-prefetch DMA row gather once N grows past ~1-2K.
    out_pad = pl.pallas_call(
        kernel,
        out_shape=jax.ShapeDtypeStruct((G_pad, HP), jnp.float32),
        in_specs=[vmem] * 6,
        out_specs=vmem,
        compiler_params=pltpu.CompilerParams(vmem_limit_bytes=32 * 1024 * 1024),
    )(idx, dsti, bidx, x_p, ea_p, slab)
    return out_pad[:num_graphs, :num_classes]


# ---------------------------------------------------------------------------
# Deterministic synthetic weights (PyTorch Linear -> W stored as [in, out]).
# ---------------------------------------------------------------------------
def _init_params(key, node_in, hidden, num_classes, edge_in=1):
    ks = iter(jax.random.split(key, 16))

    def lin(kin, kout):
        w = jax.random.normal(next(ks), (kin, kout), jnp.float32) / jnp.sqrt(kin)
        b = jax.random.normal(next(ks), (kout,), jnp.float32) * 0.01
        return w, b

    p = {}
    wm1, bm1 = lin(2 * node_in + edge_in, 128)
    wm2, bm2 = lin(128, hidden)
    wu, bu = lin(node_in + hidden, hidden)
    p["l1"] = dict(wm1=wm1, bm1=bm1, wm2=wm2, bm2=bm2, wu=wu, bu=bu)
    wm1, bm1 = lin(2 * hidden + edge_in, 128)
    wm2, bm2 = lin(128, hidden)
    wu, bu = lin(hidden + hidden, hidden)
    p["l2"] = dict(wm1=wm1, bm1=bm1, wm2=wm2, bm2=bm2, wu=wu, bu=bu)
    p["wr1"], p["br1"] = lin(hidden, 128)
    p["wr2"], p["br2"] = lin(128, num_classes)
    return p


def _reference(x, edge_index, edge_attr, batch, p, num_graphs):
    """Pure-JAX reference of the PyTorch forward (for sanity checking)."""
    def layer(xn, lp):
        x_j = xn[edge_index[0]]
        x_i = xn[edge_index[1]]
        m_in = jnp.concatenate([x_i, x_j, edge_attr], axis=-1)
        h = jnp.maximum(m_in @ lp["wm1"] + lp["bm1"], 0.0)
        msg = h @ lp["wm2"] + lp["bm2"]
        aggr = jnp.zeros((xn.shape[0], msg.shape[1]), jnp.float32).at[edge_index[1]].add(msg)
        u_in = jnp.concatenate([xn, aggr], axis=-1)
        return jnp.maximum(u_in @ lp["wu"] + lp["bu"], 0.0)

    x1 = layer(x, p["l1"])
    x2 = layer(x1, p["l2"])
    g = jnp.zeros((num_graphs, x2.shape[1]), jnp.float32).at[batch].add(x2)
    r = jnp.maximum(g @ p["wr1"] + p["br1"], 0.0)
    return r @ p["wr2"] + p["br2"]


if __name__ == "__main__":
    # Small problem consistent with the module: N nodes, E edges, 2 graphs.
    N, E, G = 16, 32, 2
    node_in, edge_in, hidden, num_classes = 8, 1, 32, 4

    key = jax.random.PRNGKey(0)
    kx, ke, ka, kw = jax.random.split(key, 4)

    x = jax.random.normal(kx, (N, node_in), jnp.float32)
    edge_index = jax.random.randint(ke, (2, E), 0, N, dtype=jnp.int32)
    edge_attr = jax.random.normal(ka, (E, edge_in), jnp.float32)
    batch = jnp.concatenate([jnp.zeros(N // 2, jnp.int32),
                             jnp.ones(N - N // 2, jnp.int32)])

    params = _init_params(kw, node_in, hidden, num_classes, edge_in)

    out = jax.block_until_ready(mpnn_forward(x, edge_index, edge_attr, batch, params, G))
    ref = _reference(x, edge_index, edge_attr, batch, params, G)

    assert out.shape == (G, num_classes)
    assert jnp.allclose(out, ref, atol=1e-4, rtol=1e-4), "mismatch vs reference"

    print("KERNEL_OK")
</pallas_src>

<mosaic_0001>
module attributes {stable_mosaic.version = 11 : i64} {
  func.func @kernel(%arg0: memref<64x1xi32, #tpu.memory_space<vmem>>, %arg1: memref<1x32xi32, #tpu.memory_space<vmem>>, %arg2: memref<1x16xi32, #tpu.memory_space<vmem>>, %arg3: memref<16x8xf32, #tpu.memory_space<vmem>>, %arg4: memref<32x1xf32, #tpu.memory_space<vmem>>, %arg5: memref<1256x128xf32, #tpu.memory_space<vmem>>, %arg6: memref<8x128xf32, #tpu.memory_space<vmem>>) attributes {dimension_semantics = [], scalar_prefetch = 0 : i64, scratch_operands = 0 : i64, tpu.core_type = #tpu.core_type<tc>} {
    %0 = tpu.iota {dimensions = array<i32: 1>} : vector<64x16xi32>
    %c0 = arith.constant 0 : index
    %c0_0 = arith.constant 0 : index
    %1 = vector.load %arg0[%c0, %c0_0] : memref<64x1xi32, #tpu.memory_space<vmem>>, vector<64x1xi32>
    %2 = vector.broadcast %1 : vector<64x1xi32> to vector<64x16xi32>
    %3 = arith.cmpi eq, %0, %2 : vector<64x16xi32>
    %4 = arith.extui %3 : vector<64x16xi1> to vector<64x16xi32>
    %5 = arith.sitofp %4 : vector<64x16xi32> to vector<64x16xf32>
    %6 = vector.extract_strided_slice %5 {offsets = [0, 0], sizes = [32, 16], strides = [1, 1]} : vector<64x16xf32> to vector<32x16xf32>
    %7 = vector.extract_strided_slice %5 {offsets = [32, 0], sizes = [32, 16], strides = [1, 1]} : vector<64x16xf32> to vector<32x16xf32>
    %8 = tpu.iota {dimensions = array<i32: 0>} : vector<16x32xi32>
    %c0_1 = arith.constant 0 : index
    %c0_2 = arith.constant 0 : index
    %9 = vector.load %arg1[%c0_1, %c0_2] : memref<1x32xi32, #tpu.memory_space<vmem>>, vector<1x32xi32>
    %10 = vector.broadcast %9 : vector<1x32xi32> to vector<16x32xi32>
    %11 = arith.cmpi eq, %8, %10 : vector<16x32xi32>
    %12 = arith.extui %11 : vector<16x32xi1> to vector<16x32xi32>
    %13 = arith.sitofp %12 : vector<16x32xi32> to vector<16x32xf32>
    %c0_3 = arith.constant 0 : index
    %c0_4 = arith.constant 0 : index
    %14 = vector.load %arg4[%c0_3, %c0_4] : memref<32x1xf32, #tpu.memory_space<vmem>>, vector<32x1xf32>
    %c0_5 = arith.constant 0 : index
    %c0_6 = arith.constant 0 : index
    %15 = vector.load %arg3[%c0_5, %c0_6] : memref<16x8xf32, #tpu.memory_space<vmem>>, vector<16x8xf32>
    %cst = arith.constant dense<0.000000e+00> : vector<64x8xf32>
    %16 = tpu.matmul %5, %15, %cst {dimension_numbers = #tpu.dot_dimension_numbers<[1], [0], [0], [1], [0, 0, 1, 1], [], []>} : vector<64x16xf32>, vector<16x8xf32>, vector<64x8xf32> -> vector<64x8xf32>
    %17 = vector.extract_strided_slice %16 {offsets = [0, 0], sizes = [32, 8], strides = [1, 1]} : vector<64x8xf32> to vector<32x8xf32>
    %18 = vector.extract_strided_slice %16 {offsets = [32, 0], sizes = [32, 8], strides = [1, 1]} : vector<64x8xf32> to vector<32x8xf32>
    %c0_7 = arith.constant 0 : index
    %c0_8 = arith.constant 0 : index
    %19 = vector.load %arg5[%c0_7, %c0_8] : memref<1256x128xf32, #tpu.memory_space<vmem>>, vector<8x128xf32>
    %cst_9 = arith.constant dense<0.000000e+00> : vector<32x128xf32>
    %20 = tpu.matmul %17, %19, %cst_9 {dimension_numbers = #tpu.dot_dimension_numbers<[1], [0], [0], [1], [0, 0, 1, 1], [], []>} : vector<32x8xf32>, vector<8x128xf32>, vector<32x128xf32> -> vector<32x128xf32>
    %c8 = arith.constant 8 : index
    %c0_10 = arith.constant 0 : index
    %21 = vector.load %arg5[%c8, %c0_10] : memref<1256x128xf32, #tpu.memory_space<vmem>>, vector<8x128xf32>
    %cst_11 = arith.constant dense<0.000000e+00> : vector<32x128xf32>
    %22 = tpu.matmul %18, %21, %cst_11 {dimension_numbers = #tpu.dot_dimension_numbers<[1], [0], [0], [1], [0, 0, 1, 1], [], []>} : vector<32x8xf32>, vector<8x128xf32>, vector<32x128xf32> -> vector<32x128xf32>
    %23 = arith.addf %20, %22 : vector<32x128xf32>
    %c16 = arith.constant 16 : index
    %c0_12 = arith.constant 0 : index
    %24 = vector.load %arg5[%c16, %c0_12] : memref<1256x128xf32, #tpu.memory_space<vmem>>, vector<1x128xf32>
    %25 = vector.broadcast %14 : vector<32x1xf32> to vector<32x128xf32>
    %26 = vector.broadcast %24 : vector<1x128xf32> to vector<32x128xf32>
    %27 = arith.mulf %25, %26 : vector<32x128xf32>
    %28 = arith.addf %23, %27 : vector<32x128xf32>
    %c24 = arith.constant 24 : index
    %c0_13 = arith.constant 0 : index
    %29 = vector.load %arg5[%c24, %c0_13] : memref<1256x128xf32, #tpu.memory_space<vmem>>, vector<1x128xf32>
    %30 = vector.broadcast %29 : vector<1x128xf32> to vector<32x128xf32>
    %31 = arith.addf %28, %30 : vector<32x128xf32>
    %cst_14 = arith.constant 0.000000e+00 : f32
    %32 = vector.broadcast %cst_14 : f32 to vector<32x128xf32>
    %33 = arith.maximumf %31, %32 : vector<32x128xf32>
    %c32 = arith.constant 32 : index
    %c0_15 = arith.constant 0 : index
    %34 = vector.load %arg5[%c32, %c0_15] : memref<1256x128xf32, #tpu.memory_space<vmem>>, vector<128x128xf32>
    %cst_16 = arith.constant dense<0.000000e+00> : vector<32x128xf32>
    %35 = tpu.matmul %33, %34, %cst_16 {dimension_numbers = #tpu.dot_dimension_numbers<[1], [0], [0], [1], [0, 0, 1, 1], [], []>} : vector<32x128xf32>, vector<128x128xf32>, vector<32x128xf32> -> vector<32x128xf32>
    %c160 = arith.constant 160 : index
    %c0_17 = arith.constant 0 : index
    %36 = vector.load %arg5[%c160, %c0_17] : memref<1256x128xf32, #tpu.memory_space<vmem>>, vector<1x128xf32>
    %37 = vector.broadcast %36 : vector<1x128xf32> to vector<32x128xf32>
    %38 = arith.addf %35, %37 : vector<32x128xf32>
    %cst_18 = arith.constant dense<0.000000e+00> : vector<16x128xf32>
    %39 = tpu.matmul %13, %38, %cst_18 {dimension_numbers = #tpu.dot_dimension_numbers<[1], [0], [0], [1], [0, 0, 1, 1], [], []>} : vector<16x32xf32>, vector<32x128xf32>, vector<16x128xf32> -> vector<16x128xf32>
    %c168 = arith.constant 168 : index
    %c0_19 = arith.constant 0 : index
    %40 = vector.load %arg5[%c168, %c0_19] : memref<1256x128xf32, #tpu.memory_space<vmem>>, vector<8x128xf32>
    %cst_20 = arith.constant dense<0.000000e+00> : vector<16x128xf32>
    %41 = tpu.matmul %15, %40, %cst_20 {dimension_numbers = #tpu.dot_dimension_numbers<[1], [0], [0], [1], [0, 0, 1, 1], [], []>} : vector<16x8xf32>, vector<8x128xf32>, vector<16x128xf32> -> vector<16x128xf32>
    %c176 = arith.constant 176 : index
    %c0_21 = arith.constant 0 : index
    %42 = vector.load %arg5[%c176, %c0_21] : memref<1256x128xf32, #tpu.memory_space<vmem>>, vector<128x128xf32>
    %cst_22 = arith.constant dense<0.000000e+00> : vector<16x128xf32>
    %43 = tpu.matmul %39, %42, %cst_22 {dimension_numbers = #tpu.dot_dimension_numbers<[1], [0], [0], [1], [0, 0, 1, 1], [], []>} : vector<16x128xf32>, vector<128x128xf32>, vector<16x128xf32> -> vector<16x128xf32>
    %44 = arith.addf %41, %43 : vector<16x128xf32>
    %c304 = arith.constant 304 : index
    %c0_23 = arith.constant 0 : index
    %45 = vector.load %arg5[%c304, %c0_23] : memref<1256x128xf32, #tpu.memory_space<vmem>>, vector<1x128xf32>
    %46 = vector.broadcast %45 : vector<1x128xf32> to vector<16x128xf32>
    %47 = arith.addf %44, %46 : vector<16x128xf32>
    %cst_24 = arith.constant 0.000000e+00 : f32
    %48 = vector.broadcast %cst_24 : f32 to vector<16x128xf32>
    %49 = arith.maximumf %47, %48 : vector<16x128xf32>
    %c312 = arith.constant 312 : index
    %c0_25 = arith.constant 0 : index
    %50 = vector.load %arg5[%c312, %c0_25] : memref<1256x128xf32, #tpu.memory_space<vmem>>, vector<128x128xf32>
    %cst_26 = arith.constant dense<0.000000e+00> : vector<16x128xf32>
    %51 = tpu.matmul %49, %50, %cst_26 {dimension_numbers = #tpu.dot_dimension_numbers<[1], [0], [0], [1], [0, 0, 1, 1], [], []>} : vector<16x128xf32>, vector<128x128xf32>, vector<16x128xf32> -> vector<16x128xf32>
    %c440 = arith.constant 440 : index
    %c0_27 = arith.constant 0 : index
    %52 = vector.load %arg5[%c440, %c0_27] : memref<1256x128xf32, #tpu.memory_space<vmem>>, vector<128x128xf32>
    %cst_28 = arith.constant dense<0.000000e+00> : vector<16x128xf32>
    %53 = tpu.matmul %49, %52, %cst_28 {dimension_numbers = #tpu.dot_dimension_numbers<[1], [0], [0], [1], [0, 0, 1, 1], [], []>} : vector<16x128xf32>, vector<128x128xf32>, vector<16x128xf32> -> vector<16x128xf32>
    %cst_29 = arith.constant dense<0.000000e+00> : vector<32x128xf32>
    %54 = tpu.matmul %6, %51, %cst_29 {dimension_numbers = #tpu.dot_dimension_numbers<[1], [0], [0], [1], [0, 0, 1, 1], [], []>} : vector<32x16xf32>, vector<16x128xf32>, vector<32x128xf32> -> vector<32x128xf32>
    %cst_30 = arith.constant dense<0.000000e+00> : vector<32x128xf32>
    %55 = tpu.matmul %7, %53, %cst_30 {dimension_numbers = #tpu.dot_dimension_numbers<[1], [0], [0], [1], [0, 0, 1, 1], [], []>} : vector<32x16xf32>, vector<16x128xf32>, vector<32x128xf32> -> vector<32x128xf32>
    %56 = arith.addf %54, %55 : vector<32x128xf32>
    %c568 = arith.constant 568 : index
    %c0_31 = arith.constant 0 : index
    %57 = vector.load %arg5[%c568, %c0_31] : memref<1256x128xf32, #tpu.memory_space<vmem>>, vector<1x128xf32>
    %58 = vector.broadcast %14 : vector<32x1xf32> to vector<32x128xf32>
    %59 = vector.broadcast %57 : vector<1x128xf32> to vector<32x128xf32>
    %60 = arith.mulf %58, %59 : vector<32x128xf32>
    %61 = arith.addf %56, %60 : vector<32x128xf32>
    %c576 = arith.constant 576 : index
    %c0_32 = arith.constant 0 : index
    %62 = vector.load %arg5[%c576, %c0_32] : memref<1256x128xf32, #tpu.memory_space<vmem>>, vector<1x128xf32>
    %63 = vector.broadcast %62 : vector<1x128xf32> to vector<32x128xf32>
    %64 = arith.addf %61, %63 : vector<32x128xf32>
    %cst_33 = arith.constant 0.000000e+00 : f32
    %65 = vector.broadcast %cst_33 : f32 to vector<32x128xf32>
    %66 = arith.maximumf %64, %65 : vector<32x128xf32>
    %c584 = arith.constant 584 : index
    %c0_34 = arith.constant 0 : index
    %67 = vector.load %arg5[%c584, %c0_34] : memref<1256x128xf32, #tpu.memory_space<vmem>>, vector<128x128xf32>
    %cst_35 = arith.constant dense<0.000000e+00> : vector<32x128xf32>
    %68 = tpu.matmul %66, %67, %cst_35 {dimension_numbers = #tpu.dot_dimension_numbers<[1], [0], [0], [1], [0, 0, 1, 1], [], []>} : vector<32x128xf32>, vector<128x128xf32>, vector<32x128xf32> -> vector<32x128xf32>
    %c712 = arith.constant 712 : index
    %c0_36 = arith.constant 0 : index
    %69 = vector.load %arg5[%c712, %c0_36] : memref<1256x128xf32, #tpu.memory_space<vmem>>, vector<1x128xf32>
    %70 = vector.broadcast %69 : vector<1x128xf32> to vector<32x128xf32>
    %71 = arith.addf %68, %70 : vector<32x128xf32>
    %cst_37 = arith.constant dense<0.000000e+00> : vector<16x128xf32>
    %72 = tpu.matmul %13, %71, %cst_37 {dimension_numbers = #tpu.dot_dimension_numbers<[1], [0], [0], [1], [0, 0, 1, 1], [], []>} : vector<16x32xf32>, vector<32x128xf32>, vector<16x128xf32> -> vector<16x128xf32>
    %c720 = arith.constant 720 : index
    %c0_38 = arith.constant 0 : index
    %73 = vector.load %arg5[%c720, %c0_38] : memref<1256x128xf32, #tpu.memory_space<vmem>>, vector<128x128xf32>
    %cst_39 = arith.constant dense<0.000000e+00> : vector<16x128xf32>
    %74 = tpu.matmul %49, %73, %cst_39 {dimension_numbers = #tpu.dot_dimension_numbers<[1], [0], [0], [1], [0, 0, 1, 1], [], []>} : vector<16x128xf32>, vector<128x128xf32>, vector<16x128xf32> -> vector<16x128xf32>
    %c848 = arith.constant 848 : index
    %c0_40 = arith.constant 0 : index
    %75 = vector.load %arg5[%c848, %c0_40] : memref<1256x128xf32, #tpu.memory_space<vmem>>, vector<128x128xf32>
    %cst_41 = arith.constant dense<0.000000e+00> : vector<16x128xf32>
    %76 = tpu.matmul %72, %75, %cst_41 {dimension_numbers = #tpu.dot_dimension_numbers<[1], [0], [0], [1], [0, 0, 1, 1], [], []>} : vector<16x128xf32>, vector<128x128xf32>, vector<16x128xf32> -> vector<16x128xf32>
    %77 = arith.addf %74, %76 : vector<16x128xf32>
    %c976 = arith.constant 976 : index
    %c0_42 = arith.constant 0 : index
    %78 = vector.load %arg5[%c976, %c0_42] : memref<1256x128xf32, #tpu.memory_space<vmem>>, vector<1x128xf32>
    %79 = vector.broadcast %78 : vector<1x128xf32> to vector<16x128xf32>
    %80 = arith.addf %77, %79 : vector<16x128xf32>
    %cst_43 = arith.constant 0.000000e+00 : f32
    %81 = vector.broadcast %cst_43 : f32 to vector<16x128xf32>
    %82 = arith.maximumf %80, %81 : vector<16x128xf32>
    %83 = tpu.iota {dimensions = array<i32: 0>} : vector<8x16xi32>
    %c0_44 = arith.constant 0 : index
    %c0_45 = arith.constant 0 : index
    %84 = vector.load %arg2[%c0_44, %c0_45] : memref<1x16xi32, #tpu.memory_space<vmem>>, vector<1x16xi32>
    %85 = vector.broadcast %84 : vector<1x16xi32> to vector<8x16xi32>
    %86 = arith.cmpi eq, %83, %85 : vector<8x16xi32>
    %87 = arith.extui %86 : vector<8x16xi1> to vector<8x16xi32>
    %88 = arith.sitofp %87 : vector<8x16xi32> to vector<8x16xf32>
    %cst_46 = arith.constant dense<0.000000e+00> : vector<8x128xf32>
    %89 = tpu.matmul %88, %82, %cst_46 {dimension_numbers = #tpu.dot_dimension_numbers<[1], [0], [0], [1], [0, 0, 1, 1], [], []>} : vector<8x16xf32>, vector<16x128xf32>, vector<8x128xf32> -> vector<8x128xf32>
    %c984 = arith.constant 984 : index
    %c0_47 = arith.constant 0 : index
    %90 = vector.load %arg5[%c984, %c0_47] : memref<1256x128xf32, #tpu.memory_space<vmem>>, vector<128x128xf32>
    %cst_48 = arith.constant dense<0.000000e+00> : vector<8x128xf32>
    %91 = tpu.matmul %89, %90, %cst_48 {dimension_numbers = #tpu.dot_dimension_numbers<[1], [0], [0], [1], [0, 0, 1, 1], [], []>} : vector<8x128xf32>, vector<128x128xf32>, vector<8x128xf32> -> vector<8x128xf32>
    %c1112 = arith.constant 1112 : index
    %c0_49 = arith.constant 0 : index
    %92 = vector.load %arg5[%c1112, %c0_49] : memref<1256x128xf32, #tpu.memory_space<vmem>>, vector<1x128xf32>
    %93 = vector.broadcast %92 : vector<1x128xf32> to vector<8x128xf32>
    %94 = arith.addf %91, %93 : vector<8x128xf32>
    %cst_50 = arith.constant 0.000000e+00 : f32
    %95 = vector.broadcast %cst_50 : f32 to vector<8x128xf32>
    %96 = arith.maximumf %94, %95 : vector<8x128xf32>
    %c1120 = arith.constant 1120 : index
    %c0_51 = arith.constant 0 : index
    %97 = vector.load %arg5[%c1120, %c0_51] : memref<1256x128xf32, #tpu.memory_space<vmem>>, vector<128x128xf32>
    %cst_52 = arith.constant dense<0.000000e+00> : vector<8x128xf32>
    %98 = tpu.matmul %96, %97, %cst_52 {dimension_numbers = #tpu.dot_dimension_numbers<[1], [0], [0], [1], [0, 0, 1, 1], [], []>} : vector<8x128xf32>, vector<128x128xf32>, vector<8x128xf32> -> vector<8x128xf32>
    %c1248 = arith.constant 1248 : index
    %c0_53 = arith.constant 0 : index
    %99 = vector.load %arg5[%c1248, %c0_53] : memref<1256x128xf32, #tpu.memory_space<vmem>>, vector<1x128xf32>
    %100 = vector.broadcast %99 : vector<1x128xf32> to vector<8x128xf32>
    %101 = arith.addf %98, %100 : vector<8x128xf32>
    %c0_54 = arith.constant 0 : index
    %c0_55 = arith.constant 0 : index
    %102 = vector.load %arg6[%c0_54, %c0_55] : memref<8x128xf32, #tpu.memory_space<vmem>>, vector<8x128xf32>
    tpu.vector_store %arg6[%c0_54, %c0_55], %101 {strides = array<i32>} : memref<8x128xf32, #tpu.memory_space<vmem>>, vector<8x128xf32>,
    return
  }
}

</mosaic_0001>

<llo_original>
// kernel: tpu_custom_call.1
$region0: #{tpu_custom_call.1}
  #allocation0 [shape = 'u32[]', space=smem, size = 0x4, offset = 0x4, fixed_abs, tag = 'smem constant byte address 0x4 - core index']
  #allocation1 [shape = 'u32[144,128]{1,0:T(1,128)}', space=vmem, size = 0x12000, scoped, tag = 'internal scratch']
  %s0 = inlined_call_operand.vmem [shape: s32[64,1], index: 0, kind: input, shape index: {}]
  %s1 = inlined_call_operand.vmem [shape: s32[1,32], index: 1, kind: input, shape index: {}]
  %s2 = inlined_call_operand.vmem [shape: s32[1,16], index: 2, kind: input, shape index: {}]
  %s3 = inlined_call_operand.vmem [shape: f32[16,8], index: 3, kind: input, shape index: {}]
  %s4 = inlined_call_operand.vmem [shape: f32[32,1], index: 4, kind: input, shape index: {}]
  %s5 = inlined_call_operand.hbm [shape: f32[1256,128], index: 5, kind: input, shape index: {}]
  %s6 = inlined_call_operand.hbm [shape: f32[8,128], index: 6, kind: output, shape index: {}]
  %s7 = sld [smem:[#allocation0]]
  $region38: #{tpu_custom_call.1} parent=0
    _
  %s9 = ssub.s32 1, %s7
  %s10 = scalar_select 0, %s9, %s7
  $region1: #{tpu_custom_call.1} parent=0
    #allocation2 [shape = 'u8[643072]{0}', space=vmem, size = 0x9d000, scoped, tag = 'input window, operand 5, single buffered']
    #allocation3 [shape = 's32[1]{0}', space=sflag, size = 0x4, scoped, tag = 'scoped memory for tpu_custom_call.1']
    #allocation4 [shape = 's32[1]{0}', space=sflag, size = 0x4, scoped, tag = 'scoped memory for tpu_custom_call.1']
    #allocation5 [shape = 'u8[4096]{0}', space=vmem, size = 0x1000, scoped, tag = 'output window, operand 0, single buffered']
    %11 = vsyncpa [#allocation3], 0
    %12 = vsyncpa [#allocation4], 0
    // Predicated region
    $region2: #{tpu_custom_call.1} parent=1 // pred_check
      _
    $region3: #{tpu_custom_call.1} parent=1 // pred_check_branch
      %14 = sbr.rel (0) target = $region5
    $region4: #{tpu_custom_call.1} parent=1 // pred_region
      _
    $region5: #{tpu_custom_call.1} parent=1 // pred_fallthru
      _
    // Predicated region
    $region6: #{tpu_custom_call.1} parent=1 // pred_check
      _
    $region7: #{tpu_custom_call.1} parent=1 // pred_check_branch
      %16 = sbr.rel (0) target = $region9
    $region8: #{tpu_custom_call.1} parent=1 // pred_region
      _
    $region9: #{tpu_custom_call.1} parent=1 // pred_fallthru
      _
    // Predicated region
    $region10: #{tpu_custom_call.1} parent=1 // pred_check
      _
    $region11: #{tpu_custom_call.1} parent=1 // pred_check_branch
      %18 = sbr.rel (0) target = $region13
    $region12: #{tpu_custom_call.1} parent=1 // pred_region
      _
    $region13: #{tpu_custom_call.1} parent=1 // pred_fallthru
      _
    // Predicated region
    $region14: #{tpu_custom_call.1} parent=1 // pred_check
      _
    $region15: #{tpu_custom_call.1} parent=1 // pred_check_branch
      %20 = sbr.rel (0) target = $region17
    $region16: #{tpu_custom_call.1} parent=1 // pred_region
      _
    $region17: #{tpu_custom_call.1} parent=1 // pred_fallthru
      _
    // Predicated region
    $region18: #{tpu_custom_call.1} parent=1 // pred_check
      _
    $region19: #{tpu_custom_call.1} parent=1 // pred_check_branch
      %22 = sbr.rel (0) target = $region21
    $region20: #{tpu_custom_call.1} parent=1 // pred_region
      _
    $region21: #{tpu_custom_call.1} parent=1 // pred_fallthru
      _
    // Predicated region
    $region22: #{tpu_custom_call.1} parent=1 // pred_check
      _
    $region23: #{tpu_custom_call.1} parent=1 // pred_check_branch
      %24 = sbr.rel (0) target = $region25
    $region24: #{tpu_custom_call.1} parent=1 // pred_region
      %s26 = ssub.s32 20096, 20096
      %27 = vsyncadd [#allocation3], %s26
      %s28 = sshll.u32 [#allocation2], 4
      %s29 = int_to_ptr.vmem [resolvable:$true] %s28
      %34 = dma.hbm_to_vmem [thread:$0]  %s5, 20096, %s29, [#allocation3], 128, 128, 8
    $region25: #{tpu_custom_call.1} parent=1 // pred_fallthru
      _
    // Predicated region
    $region26: #{tpu_custom_call.1} parent=1 // pred_check
      _
    $region27: #{tpu_custom_call.1} parent=1 // pred_check_branch
      %36 = sbr.rel (0) target = $region29
    $region28: #{tpu_custom_call.1} parent=1 // pred_region
      %37 = dma.done [#allocation3], 20096
    $region29: #{tpu_custom_call.1} parent=1 // pred_fallthru
      _
    %v38 = vlaneseq
    %v39 = vand.u32 %v38, 127
    %v40 = vld [vmem:[%s0] sm:$0xff]
    %v41 = vld [vmem:[%s0 + $0x8] sm:$0xff]
    %v42 = vld [vmem:[%s0 + $0x10] sm:$0xff]
    %v43 = vld [vmem:[%s0 + $0x18] sm:$0xff]
    %v44 = vld [vmem:[%s0 + $0x20] sm:$0xff]
    %v45 = vld [vmem:[%s0 + $0x28] sm:$0xff]
    %v46 = vld [vmem:[%s0 + $0x30] sm:$0xff]
    %v47 = vld [vmem:[%s0 + $0x38] sm:$0xff]
    %48 = vset.pattern.permute.xlu0 0
    %49 = vperm.xlu0 %48, %v40
    %v50 = vpop.permute.xlu0 %49
    %51 = vset.pattern.permute.xlu0 0
    %52 = vperm.xlu0 %51, %v41
    %v53 = vpop.permute.xlu0 %52
    %54 = vset.pattern.permute.xlu0 0
    %55 = vperm.xlu0 %54, %v42
    %v56 = vpop.permute.xlu0 %55
    %57 = vset.pattern.permute.xlu0 0
    %58 = vperm.xlu0 %57, %v43
    %v59 = vpop.permute.xlu0 %58
    %60 = vset.pattern.permute.xlu0 0
    %61 = vperm.xlu0 %60, %v44
    %v62 = vpop.permute.xlu0 %61
    %63 = vset.pattern.permute.xlu0 0
    %64 = vperm.xlu0 %63, %v45
    %v65 = vpop.permute.xlu0 %64
    %66 = vset.pattern.permute.xlu0 0
    %67 = vperm.xlu0 %66, %v46
    %v68 = vpop.permute.xlu0 %67
    %69 = vset.pattern.permute.xlu0 0
    %70 = vperm.xlu0 %69, %v47
    %v71 = vpop.permute.xlu0 %70
    %vm72 = vcmp.eq.s32.totalorder %v39, %v50
    %vm73 = vcmp.eq.s32.totalorder %v39, %v53
    %vm74 = vcmp.eq.s32.totalorder %v39, %v56
    %vm75 = vcmp.eq.s32.totalorder %v39, %v59
    %vm76 = vcmp.eq.s32.totalorder %v39, %v62
    %vm77 = vcmp.eq.s32.totalorder %v39, %v65
    %vm78 = vcmp.eq.s32.totalorder %v39, %v68
    %vm79 = vcmp.eq.s32.totalorder %v39, %v71
    %v80 = vsel %vm72, 1, 0
    %v81 = vsel %vm73, 1, 0
    %v82 = vsel %vm74, 1, 0
    %v83 = vsel %vm75, 1, 0
    %v84 = vsel %vm76, 1, 0
    %v85 = vsel %vm77, 1, 0
    %v86 = vsel %vm78, 1, 0
    %v87 = vsel %vm79, 1, 0
    %v88 = vcvt.s32.f32 %v80
    %v89 = vcvt.s32.f32 %v81
    %v90 = vcvt.s32.f32 %v82
    %v91 = vcvt.s32.f32 %v83
    %v92 = vcvt.s32.f32 %v84
    %v93 = vcvt.s32.f32 %v85
    %v94 = vcvt.s32.f32 %v86
    %v95 = vcvt.s32.f32 %v87
    %v96 = vlaneseq
    %v97 = vshrl.u32 %v96, 7
    %v98 = vadd.s32 %v97, 8
    %v99 = vld [vmem:[%s1] sm:$0x1]
    %v100 = vlaneseq
    %v101 = vshrl.u32 %v100, 7
    %v102 = vsub.s32 0, %v101
    %v103 = vrot.slane %v99, %v102
    %vm104 = vcmp.eq.s32.totalorder %v97, %v103
    %vm105 = vcmp.eq.s32.totalorder %v98, %v103
    %v106 = vsel %vm104, 1, 0
    %v107 = vsel %vm105, 1, 0
    %v108 = vcvt.s32.f32 %v106
    %v109 = vcvt.s32.f32 %v107
    %v110 = vld [vmem:[%s4] sm:$0xff]
    %v111 = vld [vmem:[%s4 + $0x8] sm:$0xff]
    %v112 = vld [vmem:[%s4 + $0x10] sm:$0xff]
    %v113 = vld [vmem:[%s4 + $0x18] sm:$0xff]
    %v114 = vld [vmem:[%s3] sm:$0xff]
    %v115 = vld [vmem:[%s3 + $0x8] sm:$0xff]
    %vm116 = vcmask 130048
    %v118 = vsel %vm116, %v88, 0
    %v121 = vsel %vm116, %v89, 0
    %v124 = vsel %vm116, %v90, 0
    %v127 = vsel %vm116, %v91, 0
    %v130 = vsel %vm116, %v92, 0
    %v133 = vsel %vm116, %v93, 0
    %v136 = vsel %vm116, %v94, 0
    %v139 = vsel %vm116, %v95, 0
    %141 = vmatprep.subr.mxu0 0.0
    %142 = vmatpush1.msra.mxu0 0.0
    %143 = vmatprep.subr.mxu0 0.0
    %144 = vmatpush1.msra.mxu0 0.0
    %145 = vmatprep.subr.mxu0 0.0
    %146 = vmatpush1.msra.mxu0 0.0
    %147 = vmatprep.subr.mxu0 0.0
    %148 = vmatpush1.msra.mxu0 0.0
    %149 = vmatprep.subr.mxu0 0.0
    %150 = vmatpush1.msra.mxu0 0.0
    %151 = vmatprep.subr.mxu0 0.0
    %152 = vmatpush1.msra.mxu0 0.0
    %153 = vmatprep.subr.mxu0 0.0
    %154 = vmatpush1.msra.mxu0 0.0
    %155 = vmatprep.subr.mxu0 0.0
    %156 = vmatpush1.msra.mxu0 0.0
    %157 = vmatprep.subr.mxu0 0.0
    %158 = vmatpush1.msra.mxu0 0.0
    %159 = vmatprep.subr.mxu0 0.0
    %160 = vmatpush1.msra.mxu0 0.0
    %161 = vmatprep.subr.mxu0 0.0
    %162 = vmatpush1.msra.mxu0 0.0
    %163 = vmatprep.subr.mxu0 0.0
    %164 = vmatpush1.msra.mxu0 0.0
    %165 = vmatprep.subr.mxu0 0.0
    %166 = vmatpush1.msra.mxu0 0.0
    %167 = vmatprep.subr.mxu0 0.0
    %168 = vmatpush1.msra.mxu0 0.0
    %169 = vmatprep.subr.mxu0 0.0
    %170 = vmatpush1.msra.mxu0 %v115
    %171 = vmatprep.subr.mxu0 0.0
    %172 = vmatpush1.msra.mxu0 %v114
    %173 = vmatprep.subr.mxu0 0.0
    %174 = vmatpush2.msra.mxu0 0.0
    %175 = vmatprep.subr.mxu0 0.0
    %176 = vmatpush2.msra.mxu0 0.0
    %177 = vmatprep.subr.mxu0 0.0
    %178 = vmatpush2.msra.mxu0 0.0
    %179 = vmatprep.subr.mxu0 0.0
    %180 = vmatpush2.msra.mxu0 0.0
    %181 = vmatprep.subr.mxu0 0.0
    %182 = vmatpush2.msra.mxu0 0.0
    %183 = vmatprep.subr.mxu0 0.0
    %184 = vmatpush2.msra.mxu0 0.0
    %185 = vmatprep.subr.mxu0 0.0
    %186 = vmatpush2.msra.mxu0 0.0
    %187 = vmatprep.subr.mxu0 0.0
    %188 = vmatpush2.msra.mxu0 0.0
    %189 = vmatprep.subr.mxu0 0.0
    %190 = vmatpush2.msra.mxu0 0.0
    %191 = vmatprep.subr.mxu0 0.0
    %192 = vmatpush2.msra.mxu0 0.0
    %193 = vmatprep.subr.mxu0 0.0
    %194 = vmatpush2.msra.mxu0 0.0
    %195 = vmatprep.subr.mxu0 0.0
    %196 = vmatpush2.msra.mxu0 0.0
    %197 = vmatprep.subr.mxu0 0.0
    %198 = vmatpush2.msra.mxu0 0.0
    %199 = vmatprep.subr.mxu0 0.0
    %200 = vmatpush2.msra.mxu0 0.0
    %201 = vmatprep.subr.mxu0 0.0
    %202 = vmatpush2.msra.mxu0 0.0
    %203 = vmatprep.subr.mxu0 0.0
    %204 = vmatpush2.msra.mxu0 0.0
    %205 = vmatprep.mubr.f32.mxu0 0.0
    %206 = vmatmul.mubr.f32.gmra.mxu0 %v118
    %v207 = vpop.f32.mrf.mxu0
    %v208 = vadd.f32 0.0, %v207
    %v209 = vpop.f32.mrf.mxu0
    %210 = vmatprep.mubr.f32.mxu0 0.0
    %211 = vmatmul.mubr.f32.gmra.mxu0 %v121
    %v212 = vpop.f32.mrf.mxu0
    %v213 = vadd.f32 0.0, %v212
    %v214 = vpop.f32.mrf.mxu0
    %215 = vmatprep.mubr.f32.mxu0 0.0
    %216 = vmatmul.mubr.f32.gmra.mxu0 %v124
    %v217 = vpop.f32.mrf.mxu0
    %v218 = vadd.f32 0.0, %v217
    %v219 = vpop.f32.mrf.mxu0
    %220 = vmatprep.mubr.f32.mxu0 0.0
    %221 = vmatmul.mubr.f32.gmra.mxu0 %v127
    %v222 = vpop.f32.mrf.mxu0
    %v223 = vadd.f32 0.0, %v222
    %v224 = vpop.f32.mrf.mxu0
    %225 = vmatprep.mubr.f32.mxu0 0.0
    %226 = vmatmul.mubr.f32.gmra.mxu0 %v130
    %v227 = vpop.f32.mrf.mxu0
    %v228 = vadd.f32 0.0, %v227
    %v229 = vpop.f32.mrf.mxu0
    %230 = vmatprep.mubr.f32.mxu0 0.0
    %231 = vmatmul.mubr.f32.gmra.mxu0 %v133
    %v232 = vpop.f32.mrf.mxu0
    %v233 = vadd.f32 0.0, %v232
    %v234 = vpop.f32.mrf.mxu0
    %235 = vmatprep.mubr.f32.mxu0 0.0
    %236 = vmatmul.mubr.f32.gmra.mxu0 %v136
    %v237 = vpop.f32.mrf.mxu0
    %v238 = vadd.f32 0.0, %v237
    %v239 = vpop.f32.mrf.mxu0
    %240 = vmatprep.mubr.f32.mxu0 0.0
    %241 = vmatmul.mubr.f32.gmra.mxu0 %v139
    %v242 = vpop.f32.mrf.mxu0
    %v243 = vadd.f32 0.0, %v242
    %v244 = vpop.f32.mrf.mxu0
    %245 = vdwg.mxu0
    %v246 = vld [vmem:[#allocation2] sm:$0xff]
    %v247 = vld [vmem:[#allocation2 + $0x8] sm:$0xff]
    %vm248 = vcmask 64512
    %v250 = vsel %vm248, %v228, 0
    %v253 = vsel %vm248, %v233, 0
    %v256 = vsel %vm248, %v238, 0
    %v259 = vsel %vm248, %v243, 0
    %261 = vmatprep.subr.mxu0 0.0
    %262 = vmatpush1.msra.mxu0 0.0
    %263 = vmatprep.subr.mxu0 0.0
    %264 = vmatpush1.msra.mxu0 0.0
    %265 = vmatprep.subr.mxu0 0.0
    %266 = vmatpush1.msra.mxu0 0.0
    %267 = vmatprep.subr.mxu0 0.0
    %268 = vmatpush1.msra.mxu0 0.0
    %269 = vmatprep.subr.mxu0 0.0
    %270 = vmatpush1.msra.mxu0 0.0
    %271 = vmatprep.subr.mxu0 0.0
    %272 = vmatpush1.msra.mxu0 0.0
    %273 = vmatprep.subr.mxu0 0.0
    %274 = vmatpush1.msra.mxu0 0.0
    %275 = vmatprep.subr.mxu0 0.0
    %276 = vmatpush1.msra.mxu0 0.0
    %277 = vmatprep.subr.mxu0 0.0
    %278 = vmatpush1.msra.mxu0 0.0
    %279 = vmatprep.subr.mxu0 0.0
    %280 = vmatpush1.msra.mxu0 0.0
    %281 = vmatprep.subr.mxu0 0.0
    %282 = vmatpush1.msra.mxu0 0.0
    %283 = vmatprep.subr.mxu0 0.0
    %284 = vmatpush1.msra.mxu0 0.0
    %285 = vmatprep.subr.mxu0 0.0
    %286 = vmatpush1.msra.mxu0 0.0
    %287 = vmatprep.subr.mxu0 0.0
    %288 = vmatpush1.msra.mxu0 0.0
    %289 = vmatprep.subr.mxu0 0.0
    %290 = vmatpush1.msra.mxu0 0.0
    %291 = vmatprep.subr.mxu0 0.0
    %292 = vmatpush1.msra.mxu0 %v247
    %293 = vmatprep.subr.mxu0 0.0
    %294 = vmatpush2.msra.mxu0 0.0
    %295 = vmatprep.subr.mxu0 0.0
    %296 = vmatpush2.msra.mxu0 0.0
    %297 = vmatprep.subr.mxu0 0.0
    %298 = vmatpush2.msra.mxu0 0.0
    %299 = vmatprep.subr.mxu0 0.0
    %300 = vmatpush2.msra.mxu0 0.0
    %301 = vmatprep.subr.mxu0 0.0
    %302 = vmatpush2.msra.mxu0 0.0
    %303 = vmatprep.subr.mxu0 0.0
    %304 = vmatpush2.msra.mxu0 0.0
    %305 = vmatprep.subr.mxu0 0.0
    %306 = vmatpush2.msra.mxu0 0.0
    %307 = vmatprep.subr.mxu0 0.0
    %308 = vmatpush2.msra.mxu0 0.0
    %309 = vmatprep.subr.mxu0 0.0
    %310 = vmatpush2.msra.mxu0 0.0
    %311 = vmatprep.subr.mxu0 0.0
    %312 = vmatpush2.msra.mxu0 0.0
    %313 = vmatprep.subr.mxu0 0.0
    %314 = vmatpush2.msra.mxu0 0.0
    %315 = vmatprep.subr.mxu0 0.0
    %316 = vmatpush2.msra.mxu0 0.0
    %317 = vmatprep.subr.mxu0 0.0
    %318 = vmatpush2.msra.mxu0 0.0
    %319 = vmatprep.subr.mxu0 0.0
    %320 = vmatpush2.msra.mxu0 0.0
    %321 = vmatprep.subr.mxu0 0.0
    %322 = vmatpush2.msra.mxu0 0.0
    %323 = vmatprep.subr.mxu0 0.0
    %324 = vmatpush2.msra.mxu0 0.0
    %325 = vmatprep.mubr.f32.mxu0 0.0
    %326 = vmatmul.mubr.f32.gmra.mxu0 %v250
    %v327 = vpop.f32.mrf.mxu0
    %v328 = vadd.f32 0.0, %v327
    %v329 = vpop.f32.mrf.mxu0
    %330 = vmatprep.mubr.f32.mxu0 0.0
    %331 = vmatmul.mubr.f32.gmra.mxu0 %v253
    %v332 = vpop.f32.mrf.mxu0
    %v333 = vadd.f32 0.0, %v332
    %v334 = vpop.f32.mrf.mxu0
    %335 = vmatprep.mubr.f32.mxu0 0.0
    %336 = vmatmul.mubr.f32.gmra.mxu0 %v256
    %v337 = vpop.f32.mrf.mxu0
    %v338 = vadd.f32 0.0, %v337
    %v339 = vpop.f32.mrf.mxu0
    %340 = vmatprep.mubr.f32.mxu0 0.0
    %341 = vmatmul.mubr.f32.gmra.mxu0 %v259
    %v342 = vpop.f32.mrf.mxu0
    %v343 = vadd.f32 0.0, %v342
    %v344 = vpop.f32.mrf.mxu0
    %345 = vdwg.mxu0
    %v347 = vsel %vm248, %v208, 0
    %v350 = vsel %vm248, %v213, 0
    %v353 = vsel %vm248, %v218, 0
    %v356 = vsel %vm248, %v223, 0
    %358 = vmatprep.subr.mxu0 0.0
    %359 = vmatpush1.msra.mxu0 0.0
    %360 = vmatprep.subr.mxu0 0.0
    %361 = vmatpush1.msra.mxu0 0.0
    %362 = vmatprep.subr.mxu0 0.0
    %363 = vmatpush1.msra.mxu0 0.0
    %364 = vmatprep.subr.mxu0 0.0
    %365 = vmatpush1.msra.mxu0 0.0
    %366 = vmatprep.subr.mxu0 0.0
    %367 = vmatpush1.msra.mxu0 0.0
    %368 = vmatprep.subr.mxu0 0.0
    %369 = vmatpush1.msra.mxu0 0.0
    %370 = vmatprep.subr.mxu0 0.0
    %371 = vmatpush1.msra.mxu0 0.0
    %372 = vmatprep.subr.mxu0 0.0
    %373 = vmatpush1.msra.mxu0 0.0
    %374 = vmatprep.subr.mxu0 0.0
    %375 = vmatpush1.msra.mxu0 0.0
    %376 = vmatprep.subr.mxu0 0.0
    %377 = vmatpush1.msra.mxu0 0.0
    %378 = vmatprep.subr.mxu0 0.0
    %379 = vmatpush1.msra.mxu0 0.0
    %380 = vmatprep.subr.mxu0 0.0
    %381 = vmatpush1.msra.mxu0 0.0
    %382 = vmatprep.subr.mxu0 0.0
    %383 = vmatpush1.msra.mxu0 0.0
    %384 = vmatprep.subr.mxu0 0.0
    %385 = vmatpush1.msra.mxu0 0.0
    %386 = vmatprep.subr.mxu0 0.0
    %387 = vmatpush1.msra.mxu0 0.0
    %388 = vmatprep.subr.mxu0 0.0
    %389 = vmatpush1.msra.mxu0 %v246
    %390 = vmatprep.subr.mxu0 0.0
    %391 = vmatpush2.msra.mxu0 0.0
    %392 = vmatprep.subr.mxu0 0.0
    %393 = vmatpush2.msra.mxu0 0.0
    %394 = vmatprep.subr.mxu0 0.0
    %395 = vmatpush2.msra.mxu0 0.0
    %396 = vmatprep.subr.mxu0 0.0
    %397 = vmatpush2.msra.mxu0 0.0
    %398 = vmatprep.subr.mxu0 0.0
    %399 = vmatpush2.msra.mxu0 0.0
    %400 = vmatprep.subr.mxu0 0.0
    %401 = vmatpush2.msra.mxu0 0.0
    %402 = vmatprep.subr.mxu0 0.0
    %403 = vmatpush2.msra.mxu0 0.0
    %404 = vmatprep.subr.mxu0 0.0
    %405 = vmatpush2.msra.mxu0 0.0
    %406 = vmatprep.subr.mxu0 0.0
    %407 = vmatpush2.msra.mxu0 0.0
    %408 = vmatprep.subr.mxu0 0.0
    %409 = vmatpush2.msra.mxu0 0.0
    %410 = vmatprep.subr.mxu0 0.0
    %411 = vmatpush2.msra.mxu0 0.0
    %412 = vmatprep.subr.mxu0 0.0
    %413 = vmatpush2.msra.mxu0 0.0
    %414 = vmatprep.subr.mxu0 0.0
    %415 = vmatpush2.msra.mxu0 0.0
    %416 = vmatprep.subr.mxu0 0.0
    %417 = vmatpush2.msra.mxu0 0.0
    %418 = vmatprep.subr.mxu0 0.0
    %419 = vmatpush2.msra.mxu0 0.0
    %420 = vmatprep.subr.mxu0 0.0
    %421 = vmatpush2.msra.mxu0 0.0
    %422 = vmatprep.mubr.f32.mxu0 0.0
    %423 = vmatmul.mubr.f32.gmra.mxu0 %v347
    %v424 = vpop.f32.mrf.mxu0
    %v425 = vadd.f32 %v328, %v424
    %v426 = vpop.f32.mrf.mxu0
    %427 = vmatprep.mubr.f32.mxu0 0.0
    %428 = vmatmul.mubr.f32.gmra.mxu0 %v350
    %v429 = vpop.f32.mrf.mxu0
    %v430 = vadd.f32 %v333, %v429
    %v431 = vpop.f32.mrf.mxu0
    %432 = vmatprep.mubr.f32.mxu0 0.0
    %433 = vmatmul.mubr.f32.gmra.mxu0 %v353
    %v434 = vpop.f32.mrf.mxu0
    %v435 = vadd.f32 %v338, %v434
    %v436 = vpop.f32.mrf.mxu0
    %437 = vmatprep.mubr.f32.mxu0 0.0
    %438 = vmatmul.mubr.f32.gmra.mxu0 %v356
    %v439 = vpop.f32.mrf.mxu0
    %v440 = vadd.f32 %v343, %v439
    %v441 = vpop.f32.mrf.mxu0
    %442 = vdwg.mxu0
    %v443 = vld [vmem:[#allocation2 + $0x10] sm:$0x1]
    %445 = vset.pattern.permute.xlu0 0
    %446 = vperm.xlu0 %445, %v110
    %v447 = vpop.permute.xlu0 %446
    %450 = vset.pattern.permute.xlu0 0
    %451 = vperm.xlu0 %450, %v111
    %v452 = vpop.permute.xlu0 %451
    %455 = vset.pattern.permute.xlu0 0
    %456 = vperm.xlu0 %455, %v112
    %v457 = vpop.permute.xlu0 %456
    %460 = vset.pattern.permute.xlu0 0
    %461 = vperm.xlu0 %460, %v113
    %v462 = vpop.permute.xlu0 %461
    %v464 = vlaneseq
    %v465 = vshrl.u32 %v464, 7
    %v466 = vsub.s32 0, %v465
    %v467 = vrot.slane %v443, %v466
    %v468 = vmul.f32 %v447, %v467
    %v469 = vmul.f32 %v452, %v467
    %v470 = vmul.f32 %v457, %v467
    %v471 = vmul.f32 %v462, %v467
    %v472 = vadd.f32 %v425, %v468
    %v473 = vadd.f32 %v430, %v469
    %v474 = vadd.f32 %v435, %v470
    %v475 = vadd.f32 %v440, %v471
    %v476 = vld [vmem:[#allocation2 + $0x18] sm:$0x1]
    %v477 = vlaneseq
    %v478 = vshrl.u32 %v477, 7
    %v479 = vsub.s32 0, %v478
    %v480 = vrot.slane %v476, %v479
    %v481 = vadd.f32 %v472, %v480
    %v482 = vadd.f32 %v473, %v480
    %v483 = vadd.f32 %v474, %v480
    %v484 = vadd.f32 %v475, %v480
    %v485 = vmax.f32 %v481, 0.0
    %v486 = vmax.f32 %v482, 0.0
    %v487 = vmax.f32 %v483, 0.0
    %v488 = vmax.f32 %v484, 0.0
    %v489 = vld [vmem:[#allocation2 + $0x20] sm:$0xff]
    %v490 = vld [vmem:[#allocation2 + $0x28] sm:$0xff]
    %v491 = vld [vmem:[#allocation2 + $0x30] sm:$0xff]
    %v492 = vld [vmem:[#allocation2 + $0x38] sm:$0xff]
    %v493 = vld [vmem:[#allocation2 + $0x40] sm:$0xff]
    %v494 = vld [vmem:[#allocation2 + $0x48] sm:$0xff]
    %v495 = vld [vmem:[#allocation2 + $0x50] sm:$0xff]
    %v496 = vld [vmem:[#allocation2 + $0x58] sm:$0xff]
    %v497 = vld [vmem:[#allocation2 + $0x60] sm:$0xff]
    %v498 = vld [vmem:[#allocation2 + $0x68] sm:$0xff]
    %v499 = vld [vmem:[#allocation2 + $0x70] sm:$0xff]
    %v500 = vld [vmem:[#allocation2 + $0x78] sm:$0xff]
    %v501 = vld [vmem:[#allocation2 + $0x80] sm:$0xff]
    %v502 = vld [vmem:[#allocation2 + $0x88] sm:$0xff]
    %v503 = vld [vmem:[#allocation2 + $0x90] sm:$0xff]
    %v504 = vld [vmem:[#allocation2 + $0x98] sm:$0xff]
    %v505 = vld [vmem:[#allocation2 + $0xa0] sm:$0x1]
    %v506 = vlaneseq
    %v507 = vshrl.u32 %v506, 7
    %v508 = vsub.s32 0, %v507
    %v509 = vrot.slane %v505, %v508
    %510 = vmatprep.subr.mxu0 0.0
    %511 = vmatpush1.msra.mxu0 %v504
    %512 = vmatprep.subr.mxu0 0.0
    %513 = vmatpush1.msra.mxu0 %v503
    %514 = vmatprep.subr.mxu0 0.0
    %515 = vmatpush1.msra.mxu0 %v502
    %516 = vmatprep.subr.mxu0 0.0
    %517 = vmatpush1.msra.mxu0 %v501
    %518 = vmatprep.subr.mxu0 0.0
    %519 = vmatpush1.msra.mxu0 %v500
    %520 = vmatprep.subr.mxu0 0.0
    %521 = vmatpush1.msra.mxu0 %v499
    %522 = vmatprep.subr.mxu0 0.0
    %523 = vmatpush1.msra.mxu0 %v498
    %524 = vmatprep.subr.mxu0 0.0
    %525 = vmatpush1.msra.mxu0 %v497
    %526 = vmatprep.subr.mxu0 0.0
    %527 = vmatpush1.msra.mxu0 %v496
    %528 = vmatprep.subr.mxu0 0.0
    %529 = vmatpush1.msra.mxu0 %v495
    %530 = vmatprep.subr.mxu0 0.0
    %531 = vmatpush1.msra.mxu0 %v494
    %532 = vmatprep.subr.mxu0 0.0
    %533 = vmatpush1.msra.mxu0 %v493
    %534 = vmatprep.subr.mxu0 0.0
    %535 = vmatpush1.msra.mxu0 %v492
    %536 = vmatprep.subr.mxu0 0.0
    %537 = vmatpush1.msra.mxu0 %v491
    %538 = vmatprep.subr.mxu0 0.0
    %539 = vmatpush1.msra.mxu0 %v490
    %540 = vmatprep.subr.mxu0 0.0
    %541 = vmatpush1.msra.mxu0 %v489
    %542 = vmatprep.subr.mxu0 0.0
    %543 = vmatpush2.msra.mxu0 0.0
    %544 = vmatprep.subr.mxu0 0.0
    %545 = vmatpush2.msra.mxu0 0.0
    %546 = vmatprep.subr.mxu0 0.0
    %547 = vmatpush2.msra.mxu0 0.0
    %548 = vmatprep.subr.mxu0 0.0
    %549 = vmatpush2.msra.mxu0 0.0
    %550 = vmatprep.subr.mxu0 0.0
    %551 = vmatpush2.msra.mxu0 0.0
    %552 = vmatprep.subr.mxu0 0.0
    %553 = vmatpush2.msra.mxu0 0.0
    %554 = vmatprep.subr.mxu0 0.0
    %555 = vmatpush2.msra.mxu0 0.0
    %556 = vmatprep.subr.mxu0 0.0
    %557 = vmatpush2.msra.mxu0 0.0
    %558 = vmatprep.subr.mxu0 0.0
    %559 = vmatpush2.msra.mxu0 0.0
    %560 = vmatprep.subr.mxu0 0.0
    %561 = vmatpush2.msra.mxu0 0.0
    %562 = vmatprep.subr.mxu0 0.0
    %563 = vmatpush2.msra.mxu0 0.0
    %564 = vmatprep.subr.mxu0 0.0
    %565 = vmatpush2.msra.mxu0 0.0
    %566 = vmatprep.subr.mxu0 0.0
    %567 = vmatpush2.msra.mxu0 0.0
    %568 = vmatprep.subr.mxu0 0.0
    %569 = vmatpush2.msra.mxu0 0.0
    %570 = vmatprep.subr.mxu0 0.0
    %571 = vmatpush2.msra.mxu0 0.0
    %572 = vmatprep.subr.mxu0 0.0
    %573 = vmatpush2.msra.mxu0 0.0
    %574 = vmatprep.mubr.f32.mxu0 0.0
    %575 = vmatmul.mubr.f32.gmra.mxu0 %v485
    %v576 = vpop.f32.mrf.mxu0
    %v577 = vadd.f32 %v509, %v576
    %v578 = vpop.f32.mrf.mxu0
    %579 = vmatprep.mubr.f32.mxu0 0.0
    %580 = vmatmul.mubr.f32.gmra.mxu0 %v486
    %v581 = vpop.f32.mrf.mxu0
    %v582 = vadd.f32 %v509, %v581
    %v583 = vpop.f32.mrf.mxu0
    %584 = vmatprep.mubr.f32.mxu0 0.0
    %585 = vmatmul.mubr.f32.gmra.mxu0 %v487
    %v586 = vpop.f32.mrf.mxu0
    %v587 = vadd.f32 %v509, %v586
    %v588 = vpop.f32.mrf.mxu0
    %589 = vmatprep.mubr.f32.mxu0 0.0
    %590 = vmatmul.mubr.f32.gmra.mxu0 %v488
    %v591 = vpop.f32.mrf.mxu0
    %v592 = vadd.f32 %v509, %v591
    %v593 = vpop.f32.mrf.mxu0
    %594 = vdwg.mxu0
    %vm595 = vcmask 261120
    %v597 = vsel %vm595, %v108, 0
    %v600 = vsel %vm595, %v109, 0
    %602 = vmatprep.subr.mxu0 0.0
    %603 = vmatpush1.msra.mxu0 0.0
    %604 = vmatprep.subr.mxu0 0.0
    %605 = vmatpush1.msra.mxu0 0.0
    %606 = vmatprep.subr.mxu0 0.0
    %607 = vmatpush1.msra.mxu0 0.0
    %608 = vmatprep.subr.mxu0 0.0
    %609 = vmatpush1.msra.mxu0 0.0
    %610 = vmatprep.subr.mxu0 0.0
    %611 = vmatpush1.msra.mxu0 0.0
    %612 = vmatprep.subr.mxu0 0.0
    %613 = vmatpush1.msra.mxu0 0.0
    %614 = vmatprep.subr.mxu0 0.0
    %615 = vmatpush1.msra.mxu0 0.0
    %616 = vmatprep.subr.mxu0 0.0
    %617 = vmatpush1.msra.mxu0 0.0
    %618 = vmatprep.subr.mxu0 0.0
    %619 = vmatpush1.msra.mxu0 0.0
    %620 = vmatprep.subr.mxu0 0.0
    %621 = vmatpush1.msra.mxu0 0.0
    %622 = vmatprep.subr.mxu0 0.0
    %623 = vmatpush1.msra.mxu0 0.0
    %624 = vmatprep.subr.mxu0 0.0
    %625 = vmatpush1.msra.mxu0 0.0
    %626 = vmatprep.subr.mxu0 0.0
    %627 = vmatpush1.msra.mxu0 %v592
    %628 = vmatprep.subr.mxu0 0.0
    %629 = vmatpush1.msra.mxu0 %v587
    %630 = vmatprep.subr.mxu0 0.0
    %631 = vmatpush1.msra.mxu0 %v582
    %632 = vmatprep.subr.mxu0 0.0
    %633 = vmatpush1.msra.mxu0 %v577
    %634 = vmatprep.subr.mxu0 0.0
    %635 = vmatpush2.msra.mxu0 0.0
    %636 = vmatprep.subr.mxu0 0.0
    %637 = vmatpush2.msra.mxu0 0.0
    %638 = vmatprep.subr.mxu0 0.0
    %639 = vmatpush2.msra.mxu0 0.0
    %640 = vmatprep.subr.mxu0 0.0
    %641 = vmatpush2.msra.mxu0 0.0
    %642 = vmatprep.subr.mxu0 0.0
    %643 = vmatpush2.msra.mxu0 0.0
    %644 = vmatprep.subr.mxu0 0.0
    %645 = vmatpush2.msra.mxu0 0.0
    %646 = vmatprep.subr.mxu0 0.0
    %647 = vmatpush2.msra.mxu0 0.0
    %648 = vmatprep.subr.mxu0 0.0
    %649 = vmatpush2.msra.mxu0 0.0
    %650 = vmatprep.subr.mxu0 0.0
    %651 = vmatpush2.msra.mxu0 0.0
    %652 = vmatprep.subr.mxu0 0.0
    %653 = vmatpush2.msra.mxu0 0.0
    %654 = vmatprep.subr.mxu0 0.0
    %655 = vmatpush2.msra.mxu0 0.0
    %656 = vmatprep.subr.mxu0 0.0
    %657 = vmatpush2.msra.mxu0 0.0
    %658 = vmatprep.subr.mxu0 0.0
    %659 = vmatpush2.msra.mxu0 0.0
    %660 = vmatprep.subr.mxu0 0.0
    %661 = vmatpush2.msra.mxu0 0.0
    %662 = vmatprep.subr.mxu0 0.0
    %663 = vmatpush2.msra.mxu0 0.0
    %664 = vmatprep.subr.mxu0 0.0
    %665 = vmatpush2.msra.mxu0 0.0
    %666 = vmatprep.mubr.f32.mxu0 0.0
    %667 = vmatmul.mubr.f32.gmra.mxu0 %v597
    %v668 = vpop.f32.mrf.mxu0
    %v669 = vadd.f32 0.0, %v668
    %v670 = vpop.f32.mrf.mxu0
    %671 = vmatprep.mubr.f32.mxu0 0.0
    %672 = vmatmul.mubr.f32.gmra.mxu0 %v600
    %v673 = vpop.f32.mrf.mxu0
    %v674 = vadd.f32 0.0, %v673
    %v675 = vpop.f32.mrf.mxu0
    %676 = vdwg.mxu0
    %v677 = vld [vmem:[#allocation2 + $0xa8] sm:$0xff]
    %v678 = vld [vmem:[#allocation2 + $0xb0] sm:$0xff]
    %v679 = vld [vmem:[#allocation2 + $0xb8] sm:$0xff]
    %v680 = vld [vmem:[#allocation2 + $0xc0] sm:$0xff]
    %v681 = vld [vmem:[#allocation2 + $0xc8] sm:$0xff]
    %v682 = vld [vmem:[#allocation2 + $0xd0] sm:$0xff]
    %v683 = vld [vmem:[#allocation2 + $0xd8] sm:$0xff]
    %v684 = vld [vmem:[#allocation2 + $0xe0] sm:$0xff]
    %v685 = vld [vmem:[#allocation2 + $0xe8] sm:$0xff]
    %v686 = vld [vmem:[#allocation2 + $0xf0] sm:$0xff]
    %v687 = vld [vmem:[#allocation2 + $0xf8] sm:$0xff]
    %v688 = vld [vmem:[#allocation2 + $0x100] sm:$0xff]
    %v689 = vld [vmem:[#allocation2 + $0x108] sm:$0xff]
    %v690 = vld [vmem:[#allocation2 + $0x110] sm:$0xff]
    %v691 = vld [vmem:[#allocation2 + $0x118] sm:$0xff]
    %v692 = vld [vmem:[#allocation2 + $0x120] sm:$0xff]
    %v693 = vld [vmem:[#allocation2 + $0x128] sm:$0xff]
    %694 = vmatprep.subr.mxu0 0.0
    %695 = vmatpush1.msra.mxu0 %v693
    %696 = vmatprep.subr.mxu0 0.0
    %697 = vmatpush1.msra.mxu0 %v692
    %698 = vmatprep.subr.mxu0 0.0
    %699 = vmatpush1.msra.mxu0 %v691
    %700 = vmatprep.subr.mxu0 0.0
    %701 = vmatpush1.msra.mxu0 %v690
    %702 = vmatprep.subr.mxu0 0.0
    %703 = vmatpush1.msra.mxu0 %v689
    %704 = vmatprep.subr.mxu0 0.0
    %705 = vmatpush1.msra.mxu0 %v688
    %706 = vmatprep.subr.mxu0 0.0
    %707 = vmatpush1.msra.mxu0 %v687
    %708 = vmatprep.subr.mxu0 0.0
    %709 = vmatpush1.msra.mxu0 %v686
    %710 = vmatprep.subr.mxu0 0.0
    %711 = vmatpush1.msra.mxu0 %v685
    %712 = vmatprep.subr.mxu0 0.0
    %713 = vmatpush1.msra.mxu0 %v684
    %714 = vmatprep.subr.mxu0 0.0
    %715 = vmatpush1.msra.mxu0 %v683
    %716 = vmatprep.subr.mxu0 0.0
    %717 = vmatpush1.msra.mxu0 %v682
    %718 = vmatprep.subr.mxu0 0.0
    %719 = vmatpush1.msra.mxu0 %v681
    %720 = vmatprep.subr.mxu0 0.0
    %721 = vmatpush1.msra.mxu0 %v680
    %722 = vmatprep.subr.mxu0 0.0
    %723 = vmatpush1.msra.mxu0 %v679
    %724 = vmatprep.subr.mxu0 0.0
    %725 = vmatpush1.msra.mxu0 %v678
    %726 = vmatprep.subr.mxu0 0.0
    %727 = vmatpush2.msra.mxu0 0.0
    %728 = vmatprep.subr.mxu0 0.0
    %729 = vmatpush2.msra.mxu0 0.0
    %730 = vmatprep.subr.mxu0 0.0
    %731 = vmatpush2.msra.mxu0 0.0
    %732 = vmatprep.subr.mxu0 0.0
    %733 = vmatpush2.msra.mxu0 0.0
    %734 = vmatprep.subr.mxu0 0.0
    %735 = vmatpush2.msra.mxu0 0.0
    %736 = vmatprep.subr.mxu0 0.0
    %737 = vmatpush2.msra.mxu0 0.0
    %738 = vmatprep.subr.mxu0 0.0
    %739 = vmatpush2.msra.mxu0 0.0
    %740 = vmatprep.subr.mxu0 0.0
    %741 = vmatpush2.msra.mxu0 0.0
    %742 = vmatprep.subr.mxu0 0.0
    %743 = vmatpush2.msra.mxu0 0.0
    %744 = vmatprep.subr.mxu0 0.0
    %745 = vmatpush2.msra.mxu0 0.0
    %746 = vmatprep.subr.mxu0 0.0
    %747 = vmatpush2.msra.mxu0 0.0
    %748 = vmatprep.subr.mxu0 0.0
    %749 = vmatpush2.msra.mxu0 0.0
    %750 = vmatprep.subr.mxu0 0.0
    %751 = vmatpush2.msra.mxu0 0.0
    %752 = vmatprep.subr.mxu0 0.0
    %753 = vmatpush2.msra.mxu0 0.0
    %754 = vmatprep.subr.mxu0 0.0
    %755 = vmatpush2.msra.mxu0 0.0
    %756 = vmatprep.subr.mxu0 0.0
    %757 = vmatpush2.msra.mxu0 0.0
    %758 = vmatprep.mubr.f32.mxu0 0.0
    %759 = vmatmul.mubr.f32.gmra.mxu0 %v669
    %v760 = vpop.f32.mrf.mxu0
    %v761 = vadd.f32 0.0, %v760
    %v762 = vpop.f32.mrf.mxu0
    %763 = vmatprep.mubr.f32.mxu0 0.0
    %764 = vmatmul.mubr.f32.gmra.mxu0 %v674
    %v765 = vpop.f32.mrf.mxu0
    %v766 = vadd.f32 0.0, %v765
    %v767 = vpop.f32.mrf.mxu0
    %768 = vdwg.mxu0
    %v770 = vsel %vm248, %v114, 0
    %v773 = vsel %vm248, %v115, 0
    %775 = vmatprep.subr.mxu0 0.0
    %776 = vmatpush1.msra.mxu0 0.0
    %777 = vmatprep.subr.mxu0 0.0
    %778 = vmatpush1.msra.mxu0 0.0
    %779 = vmatprep.subr.mxu0 0.0
    %780 = vmatpush1.msra.mxu0 0.0
    %781 = vmatprep.subr.mxu0 0.0
    %782 = vmatpush1.msra.mxu0 0.0
    %783 = vmatprep.subr.mxu0 0.0
    %784 = vmatpush1.msra.mxu0 0.0
    %785 = vmatprep.subr.mxu0 0.0
    %786 = vmatpush1.msra.mxu0 0.0
    %787 = vmatprep.subr.mxu0 0.0
    %788 = vmatpush1.msra.mxu0 0.0
    %789 = vmatprep.subr.mxu0 0.0
    %790 = vmatpush1.msra.mxu0 0.0
    %791 = vmatprep.subr.mxu0 0.0
    %792 = vmatpush1.msra.mxu0 0.0
    %793 = vmatprep.subr.mxu0 0.0
    %794 = vmatpush1.msra.mxu0 0.0
    %795 = vmatprep.subr.mxu0 0.0
    %796 = vmatpush1.msra.mxu0 0.0
    %797 = vmatprep.subr.mxu0 0.0
    %798 = vmatpush1.msra.mxu0 0.0
    %799 = vmatprep.subr.mxu0 0.0
    %800 = vmatpush1.msra.mxu0 0.0
    %801 = vmatprep.subr.mxu0 0.0
    %802 = vmatpush1.msra.mxu0 0.0
    %803 = vmatprep.subr.mxu0 0.0
    %804 = vmatpush1.msra.mxu0 0.0
    %805 = vmatprep.subr.mxu0 0.0
    %806 = vmatpush1.msra.mxu0 %v677
    %807 = vmatprep.subr.mxu0 0.0
    %808 = vmatpush2.msra.mxu0 0.0
    %809 = vmatprep.subr.mxu0 0.0
    %810 = vmatpush2.msra.mxu0 0.0
    %811 = vmatprep.subr.mxu0 0.0
    %812 = vmatpush2.msra.mxu0 0.0
    %813 = vmatprep.subr.mxu0 0.0
    %814 = vmatpush2.msra.mxu0 0.0
    %815 = vmatprep.subr.mxu0 0.0
    %816 = vmatpush2.msra.mxu0 0.0
    %817 = vmatprep.subr.mxu0 0.0
    %818 = vmatpush2.msra.mxu0 0.0
    %819 = vmatprep.subr.mxu0 0.0
    %820 = vmatpush2.msra.mxu0 0.0
    %821 = vmatprep.subr.mxu0 0.0
    %822 = vmatpush2.msra.mxu0 0.0
    %823 = vmatprep.subr.mxu0 0.0
    %824 = vmatpush2.msra.mxu0 0.0
    %825 = vmatprep.subr.mxu0 0.0
    %826 = vmatpush2.msra.mxu0 0.0
    %827 = vmatprep.subr.mxu0 0.0
    %828 = vmatpush2.msra.mxu0 0.0
    %829 = vmatprep.subr.mxu0 0.0
    %830 = vmatpush2.msra.mxu0 0.0
    %831 = vmatprep.subr.mxu0 0.0
    %832 = vmatpush2.msra.mxu0 0.0
    %833 = vmatprep.subr.mxu0 0.0
    %834 = vmatpush2.msra.mxu0 0.0
    %835 = vmatprep.subr.mxu0 0.0
    %836 = vmatpush2.msra.mxu0 0.0
    %837 = vmatprep.subr.mxu0 0.0
    %838 = vmatpush2.msra.mxu0 0.0
    %839 = vmatprep.mubr.f32.mxu0 0.0
    %840 = vmatmul.mubr.f32.gmra.mxu0 %v770
    %v841 = vpop.f32.mrf.mxu0
    %v842 = vadd.f32 %v761, %v841
    %v843 = vpop.f32.mrf.mxu0
    %844 = vmatprep.mubr.f32.mxu0 0.0
    %845 = vmatmul.mubr.f32.gmra.mxu0 %v773
    %v846 = vpop.f32.mrf.mxu0
    %v847 = vadd.f32 %v766, %v846
    %v848 = vpop.f32.mrf.mxu0
    %849 = vdwg.mxu0
    %v850 = vld [vmem:[#allocation2 + $0x130] sm:$0x1]
    %v851 = vlaneseq
    %v852 = vshrl.u32 %v851, 7
    %v853 = vsub.s32 0, %v852
    %v854 = vrot.slane %v850, %v853
    %v855 = vadd.f32 %v842, %v854
    %v856 = vadd.f32 %v847, %v854
    %v857 = vmax.f32 %v855, 0.0
    %v858 = vmax.f32 %v856, 0.0
    %v859 = vld [vmem:[#allocation2 + $0x138] sm:$0xff]
    %v860 = vld [vmem:[#allocation2 + $0x140] sm:$0xff]
    %v861 = vld [vmem:[#allocation2 + $0x148] sm:$0xff]
    %v862 = vld [vmem:[#allocation2 + $0x150] sm:$0xff]
    %v863 = vld [vmem:[#allocation2 + $0x158] sm:$0xff]
    %v864 = vld [vmem:[#allocation2 + $0x160] sm:$0xff]
    %v865 = vld [vmem:[#allocation2 + $0x168] sm:$0xff]
    %v866 = vld [vmem:[#allocation2 + $0x170] sm:$0xff]
    %v867 = vld [vmem:[#allocation2 + $0x178] sm:$0xff]
    %v868 = vld [vmem:[#allocation2 + $0x180] sm:$0xff]
    %v869 = vld [vmem:[#allocation2 + $0x188] sm:$0xff]
    %v870 = vld [vmem:[#allocation2 + $0x190] sm:$0xff]
    %v871 = vld [vmem:[#allocation2 + $0x198] sm:$0xff]
    %v872 = vld [vmem:[#allocation2 + $0x1a0] sm:$0xff]
    %v873 = vld [vmem:[#allocation2 + $0x1a8] sm:$0xff]
    %v874 = vld [vmem:[#allocation2 + $0x1b0] sm:$0xff]
    %875 = vmatprep.subr.mxu0 0.0
    %876 = vmatpush1.msra.mxu0 %v874
    %877 = vmatprep.subr.mxu0 0.0
    %878 = vmatpush1.msra.mxu0 %v873
    %879 = vmatprep.subr.mxu0 0.0
    %880 = vmatpush1.msra.mxu0 %v872
    %881 = vmatprep.subr.mxu0 0.0
    %882 = vmatpush1.msra.mxu0 %v871
    %883 = vmatprep.subr.mxu0 0.0
    %884 = vmatpush1.msra.mxu0 %v870
    %885 = vmatprep.subr.mxu0 0.0
    %886 = vmatpush1.msra.mxu0 %v869
    %887 = vmatprep.subr.mxu0 0.0
    %888 = vmatpush1.msra.mxu0 %v868
    %889 = vmatprep.subr.mxu0 0.0
    %890 = vmatpush1.msra.mxu0 %v867
    %891 = vmatprep.subr.mxu0 0.0
    %892 = vmatpush1.msra.mxu0 %v866
    %893 = vmatprep.subr.mxu0 0.0
    %894 = vmatpush1.msra.mxu0 %v865
    %895 = vmatprep.subr.mxu0 0.0
    %896 = vmatpush1.msra.mxu0 %v864
    %897 = vmatprep.subr.mxu0 0.0
    %898 = vmatpush1.msra.mxu0 %v863
    %899 = vmatprep.subr.mxu0 0.0
    %900 = vmatpush1.msra.mxu0 %v862
    %901 = vmatprep.subr.mxu0 0.0
    %902 = vmatpush1.msra.mxu0 %v861
    %903 = vmatprep.subr.mxu0 0.0
    %904 = vmatpush1.msra.mxu0 %v860
    %905 = vmatprep.subr.mxu0 0.0
    %906 = vmatpush1.msra.mxu0 %v859
    %907 = vmatprep.subr.mxu0 0.0
    %908 = vmatpush2.msra.mxu0 0.0
    %909 = vmatprep.subr.mxu0 0.0
    %910 = vmatpush2.msra.mxu0 0.0
    %911 = vmatprep.subr.mxu0 0.0
    %912 = vmatpush2.msra.mxu0 0.0
    %913 = vmatprep.subr.mxu0 0.0
    %914 = vmatpush2.msra.mxu0 0.0
    %915 = vmatprep.subr.mxu0 0.0
    %916 = vmatpush2.msra.mxu0 0.0
    %917 = vmatprep.subr.mxu0 0.0
    %918 = vmatpush2.msra.mxu0 0.0
    %919 = vmatprep.subr.mxu0 0.0
    %920 = vmatpush2.msra.mxu0 0.0
    %921 = vmatprep.subr.mxu0 0.0
    %922 = vmatpush2.msra.mxu0 0.0
    %923 = vmatprep.subr.mxu0 0.0
    %924 = vmatpush2.msra.mxu0 0.0
    %925 = vmatprep.subr.mxu0 0.0
    %926 = vmatpush2.msra.mxu0 0.0
    %927 = vmatprep.subr.mxu0 0.0
    %928 = vmatpush2.msra.mxu0 0.0
    %929 = vmatprep.subr.mxu0 0.0
    %930 = vmatpush2.msra.mxu0 0.0
    %931 = vmatprep.subr.mxu0 0.0
    %932 = vmatpush2.msra.mxu0 0.0
    %933 = vmatprep.subr.mxu0 0.0
    %934 = vmatpush2.msra.mxu0 0.0
    %935 = vmatprep.subr.mxu0 0.0
    %936 = vmatpush2.msra.mxu0 0.0
    %937 = vmatprep.subr.mxu0 0.0
    %938 = vmatpush2.msra.mxu0 0.0
    %939 = vmatprep.mubr.f32.mxu0 0.0
    %940 = vmatmul.mubr.f32.gmra.mxu0 %v857
    %v941 = vpop.f32.mrf.mxu0
    %v942 = vadd.f32 0.0, %v941
    %v943 = vpop.f32.mrf.mxu0
    %944 = vmatprep.mubr.f32.mxu0 0.0
    %945 = vmatmul.mubr.f32.gmra.mxu0 %v858
    %v946 = vpop.f32.mrf.mxu0
    %v947 = vadd.f32 0.0, %v946
    %v948 = vpop.f32.mrf.mxu0
    %949 = vdwg.mxu0
    %v950 = vld [vmem:[#allocation2 + $0x1b8] sm:$0xff]
    %v951 = vld [vmem:[#allocation2 + $0x1c0] sm:$0xff]
    %v952 = vld [vmem:[#allocation2 + $0x1c8] sm:$0xff]
    %v953 = vld [vmem:[#allocation2 + $0x1d0] sm:$0xff]
    %v954 = vld [vmem:[#allocation2 + $0x1d8] sm:$0xff]
    %v955 = vld [vmem:[#allocation2 + $0x1e0] sm:$0xff]
    %v956 = vld [vmem:[#allocation2 + $0x1e8] sm:$0xff]
    %v957 = vld [vmem:[#allocation2 + $0x1f0] sm:$0xff]
    %v958 = vld [vmem:[#allocation2 + $0x1f8] sm:$0xff]
    %v959 = vld [vmem:[#allocation2 + $0x200] sm:$0xff]
    %v960 = vld [vmem:[#allocation2 + $0x208] sm:$0xff]
    %v961 = vld [vmem:[#allocation2 + $0x210] sm:$0xff]
    %v962 = vld [vmem:[#allocation2 + $0x218] sm:$0xff]
    %v963 = vld [vmem:[#allocation2 + $0x220] sm:$0xff]
    %v964 = vld [vmem:[#allocation2 + $0x228] sm:$0xff]
    %v965 = vld [vmem:[#allocation2 + $0x230] sm:$0xff]
    %966 = vmatprep.subr.mxu0 0.0
    %967 = vmatpush1.msra.mxu0 %v965
    %968 = vmatprep.subr.mxu0 0.0
    %969 = vmatpush1.msra.mxu0 %v964
    %970 = vmatprep.subr.mxu0 0.0
    %971 = vmatpush1.msra.mxu0 %v963
    %972 = vmatprep.subr.mxu0 0.0
    %973 = vmatpush1.msra.mxu0 %v962
    %974 = vmatprep.subr.mxu0 0.0
    %975 = vmatpush1.msra.mxu0 %v961
    %976 = vmatprep.subr.mxu0 0.0
    %977 = vmatpush1.msra.mxu0 %v960
    %978 = vmatprep.subr.mxu0 0.0
    %979 = vmatpush1.msra.mxu0 %v959
    %980 = vmatprep.subr.mxu0 0.0
    %981 = vmatpush1.msra.mxu0 %v958
    %982 = vmatprep.subr.mxu0 0.0
    %983 = vmatpush1.msra.mxu0 %v957
    %984 = vmatprep.subr.mxu0 0.0
    %985 = vmatpush1.msra.mxu0 %v956
    %986 = vmatprep.subr.mxu0 0.0
    %987 = vmatpush1.msra.mxu0 %v955
    %988 = vmatprep.subr.mxu0 0.0
    %989 = vmatpush1.msra.mxu0 %v954
    %990 = vmatprep.subr.mxu0 0.0
    %991 = vmatpush1.msra.mxu0 %v953
    %992 = vmatprep.subr.mxu0 0.0
    %993 = vmatpush1.msra.mxu0 %v952
    %994 = vmatprep.subr.mxu0 0.0
    %995 = vmatpush1.msra.mxu0 %v951
    %996 = vmatprep.subr.mxu0 0.0
    %997 = vmatpush1.msra.mxu0 %v950
    %998 = vmatprep.subr.mxu0 0.0
    %999 = vmatpush2.msra.mxu0 0.0
    %1000 = vmatprep.subr.mxu0 0.0
    %1001 = vmatpush2.msra.mxu0 0.0
    %1002 = vmatprep.subr.mxu0 0.0
    %1003 = vmatpush2.msra.mxu0 0.0
    %1004 = vmatprep.subr.mxu0 0.0
    %1005 = vmatpush2.msra.mxu0 0.0
    %1006 = vmatprep.subr.mxu0 0.0
    %1007 = vmatpush2.msra.mxu0 0.0
    %1008 = vmatprep.subr.mxu0 0.0
    %1009 = vmatpush2.msra.mxu0 0.0
    %1010 = vmatprep.subr.mxu0 0.0
    %1011 = vmatpush2.msra.mxu0 0.0
    %1012 = vmatprep.subr.mxu0 0.0
    %1013 = vmatpush2.msra.mxu0 0.0
    %1014 = vmatprep.subr.mxu0 0.0
    %1015 = vmatpush2.msra.mxu0 0.0
    %1016 = vmatprep.subr.mxu0 0.0
    %1017 = vmatpush2.msra.mxu0 0.0
    %1018 = vmatprep.subr.mxu0 0.0
    %1019 = vmatpush2.msra.mxu0 0.0
    %1020 = vmatprep.subr.mxu0 0.0
    %1021 = vmatpush2.msra.mxu0 0.0
    %1022 = vmatprep.subr.mxu0 0.0
    %1023 = vmatpush2.msra.mxu0 0.0
    %1024 = vmatprep.subr.mxu0 0.0
    %1025 = vmatpush2.msra.mxu0 0.0
    %1026 = vmatprep.subr.mxu0 0.0
    %1027 = vmatpush2.msra.mxu0 0.0
    %1028 = vmatprep.subr.mxu0 0.0
    %1029 = vmatpush2.msra.mxu0 0.0
    %1030 = vmatprep.mubr.f32.mxu0 0.0
    %1031 = vmatmul.mubr.f32.gmra.mxu0 %v857
    %v1032 = vpop.f32.mrf.mxu0
    %v1033 = vadd.f32 0.0, %v1032
    %v1034 = vpop.f32.mrf.mxu0
    %1035 = vmatprep.mubr.f32.mxu0 0.0
    %1036 = vmatmul.mubr.f32.gmra.mxu0 %v858
    %v1037 = vpop.f32.mrf.mxu0
    %v1038 = vadd.f32 0.0, %v1037
    %v1039 = vpop.f32.mrf.mxu0
    %1040 = vdwg.mxu0
    %1041 = vmatprep.subr.mxu0 0.0
    %1042 = vmatpush1.msra.mxu0 0.0
    %1043 = vmatprep.subr.mxu0 0.0
    %1044 = vmatpush1.msra.mxu0 0.0
    %1045 = vmatprep.subr.mxu0 0.0
    %1046 = vmatpush1.msra.mxu0 0.0
    %1047 = vmatprep.subr.mxu0 0.0
    %1048 = vmatpush1.msra.mxu0 0.0
    %1049 = vmatprep.subr.mxu0 0.0
    %1050 = vmatpush1.msra.mxu0 0.0
    %1051 = vmatprep.subr.mxu0 0.0
    %1052 = vmatpush1.msra.mxu0 0.0
    %1053 = vmatprep.subr.mxu0 0.0
    %1054 = vmatpush1.msra.mxu0 0.0
    %1055 = vmatprep.subr.mxu0 0.0
    %1056 = vmatpush1.msra.mxu0 0.0
    %1057 = vmatprep.subr.mxu0 0.0
    %1058 = vmatpush1.msra.mxu0 0.0
    %1059 = vmatprep.subr.mxu0 0.0
    %1060 = vmatpush1.msra.mxu0 0.0
    %1061 = vmatprep.subr.mxu0 0.0
    %1062 = vmatpush1.msra.mxu0 0.0
    %1063 = vmatprep.subr.mxu0 0.0
    %1064 = vmatpush1.msra.mxu0 0.0
    %1065 = vmatprep.subr.mxu0 0.0
    %1066 = vmatpush1.msra.mxu0 0.0
    %1067 = vmatprep.subr.mxu0 0.0
    %1068 = vmatpush1.msra.mxu0 0.0
    %1069 = vmatprep.subr.mxu0 0.0
    %1070 = vmatpush1.msra.mxu0 %v1038
    %1071 = vmatprep.subr.mxu0 0.0
    %1072 = vmatpush1.msra.mxu0 %v1033
    %1073 = vmatprep.subr.mxu0 0.0
    %1074 = vmatpush2.msra.mxu0 0.0
    %1075 = vmatprep.subr.mxu0 0.0
    %1076 = vmatpush2.msra.mxu0 0.0
    %1077 = vmatprep.subr.mxu0 0.0
    %1078 = vmatpush2.msra.mxu0 0.0
    %1079 = vmatprep.subr.mxu0 0.0
    %1080 = vmatpush2.msra.mxu0 0.0
    %1081 = vmatprep.subr.mxu0 0.0
    %1082 = vmatpush2.msra.mxu0 0.0
    %1083 = vmatprep.subr.mxu0 0.0
    %1084 = vmatpush2.msra.mxu0 0.0
    %1085 = vmatprep.subr.mxu0 0.0
    %1086 = vmatpush2.msra.mxu0 0.0
    %1087 = vmatprep.subr.mxu0 0.0
    %1088 = vmatpush2.msra.mxu0 0.0
    %1089 = vmatprep.subr.mxu0 0.0
    %1090 = vmatpush2.msra.mxu0 0.0
    %1091 = vmatprep.subr.mxu0 0.0
    %1092 = vmatpush2.msra.mxu0 0.0
    %1093 = vmatprep.subr.mxu0 0.0
    %1094 = vmatpush2.msra.mxu0 0.0
    %1095 = vmatprep.subr.mxu0 0.0
    %1096 = vmatpush2.msra.mxu0 0.0
    %1097 = vmatprep.subr.mxu0 0.0
    %1098 = vmatpush2.msra.mxu0 0.0
    %1099 = vmatprep.subr.mxu0 0.0
    %1100 = vmatpush2.msra.mxu0 0.0
    %1101 = vmatprep.subr.mxu0 0.0
    %1102 = vmatpush2.msra.mxu0 0.0
    %1103 = vmatprep.subr.mxu0 0.0
    %1104 = vmatpush2.msra.mxu0 0.0
    %1105 = vmatprep.mubr.f32.mxu0 0.0
    %1106 = vmatmul.mubr.f32.gmra.mxu0 %v130
    %v1107 = vpop.f32.mrf.mxu0
    %v1108 = vadd.f32 0.0, %v1107
    %v1109 = vpop.f32.mrf.mxu0
    %1110 = vmatprep.mubr.f32.mxu0 0.0
    %1111 = vmatmul.mubr.f32.gmra.mxu0 %v133
    %v1112 = vpop.f32.mrf.mxu0
    %v1113 = vadd.f32 0.0, %v1112
    %v1114 = vpop.f32.mrf.mxu0
    %1115 = vmatprep.mubr.f32.mxu0 0.0
    %1116 = vmatmul.mubr.f32.gmra.mxu0 %v136
    %v1117 = vpop.f32.mrf.mxu0
    %v1118 = vadd.f32 0.0, %v1117
    %v1119 = vpop.f32.mrf.mxu0
    %1120 = vmatprep.mubr.f32.mxu0 0.0
    %1121 = vmatmul.mubr.f32.gmra.mxu0 %v139
    %v1122 = vpop.f32.mrf.mxu0
    %v1123 = vadd.f32 0.0, %v1122
    %v1124 = vpop.f32.mrf.mxu0
    %1125 = vdwg.mxu0
    %1126 = vmatprep.subr.mxu0 0.0
    %1127 = vmatpush1.msra.mxu0 0.0
    %1128 = vmatprep.subr.mxu0 0.0
    %1129 = vmatpush1.msra.mxu0 0.0
    %1130 = vmatprep.subr.mxu0 0.0
    %1131 = vmatpush1.msra.mxu0 0.0
    %1132 = vmatprep.subr.mxu0 0.0
    %1133 = vmatpush1.msra.mxu0 0.0
    %1134 = vmatprep.subr.mxu0 0.0
    %1135 = vmatpush1.msra.mxu0 0.0
    %1136 = vmatprep.subr.mxu0 0.0
    %1137 = vmatpush1.msra.mxu0 0.0
    %1138 = vmatprep.subr.mxu0 0.0
    %1139 = vmatpush1.msra.mxu0 0.0
    %1140 = vmatprep.subr.mxu0 0.0
    %1141 = vmatpush1.msra.mxu0 0.0
    %1142 = vmatprep.subr.mxu0 0.0
    %1143 = vmatpush1.msra.mxu0 0.0
    %1144 = vmatprep.subr.mxu0 0.0
    %1145 = vmatpush1.msra.mxu0 0.0
    %1146 = vmatprep.subr.mxu0 0.0
    %1147 = vmatpush1.msra.mxu0 0.0
    %1148 = vmatprep.subr.mxu0 0.0
    %1149 = vmatpush1.msra.mxu0 0.0
    %1150 = vmatprep.subr.mxu0 0.0
    %1151 = vmatpush1.msra.mxu0 0.0
    %1152 = vmatprep.subr.mxu0 0.0
    %1153 = vmatpush1.msra.mxu0 0.0
    %1154 = vmatprep.subr.mxu0 0.0
    %1155 = vmatpush1.msra.mxu0 %v947
    %1156 = vmatprep.subr.mxu0 0.0
    %1157 = vmatpush1.msra.mxu0 %v942
    %1158 = vmatprep.subr.mxu0 0.0
    %1159 = vmatpush2.msra.mxu0 0.0
    %1160 = vmatprep.subr.mxu0 0.0
    %1161 = vmatpush2.msra.mxu0 0.0
    %1162 = vmatprep.subr.mxu0 0.0
    %1163 = vmatpush2.msra.mxu0 0.0
    %1164 = vmatprep.subr.mxu0 0.0
    %1165 = vmatpush2.msra.mxu0 0.0
    %1166 = vmatprep.subr.mxu0 0.0
    %1167 = vmatpush2.msra.mxu0 0.0
    %1168 = vmatprep.subr.mxu0 0.0
    %1169 = vmatpush2.msra.mxu0 0.0
    %1170 = vmatprep.subr.mxu0 0.0
    %1171 = vmatpush2.msra.mxu0 0.0
    %1172 = vmatprep.subr.mxu0 0.0
    %1173 = vmatpush2.msra.mxu0 0.0
    %1174 = vmatprep.subr.mxu0 0.0
    %1175 = vmatpush2.msra.mxu0 0.0
    %1176 = vmatprep.subr.mxu0 0.0
    %1177 = vmatpush2.msra.mxu0 0.0
    %1178 = vmatprep.subr.mxu0 0.0
    %1179 = vmatpush2.msra.mxu0 0.0
    %1180 = vmatprep.subr.mxu0 0.0
    %1181 = vmatpush2.msra.mxu0 0.0
    %1182 = vmatprep.subr.mxu0 0.0
    %1183 = vmatpush2.msra.mxu0 0.0
    %1184 = vmatprep.subr.mxu0 0.0
    %1185 = vmatpush2.msra.mxu0 0.0
    %1186 = vmatprep.subr.mxu0 0.0
    %1187 = vmatpush2.msra.mxu0 0.0
    %1188 = vmatprep.subr.mxu0 0.0
    %1189 = vmatpush2.msra.mxu0 0.0
    %1190 = vmatprep.mubr.f32.mxu0 0.0
    %1191 = vmatmul.mubr.f32.gmra.mxu0 %v118
    %v1192 = vpop.f32.mrf.mxu0
    %v1193 = vadd.f32 %v1108, %v1192
    %v1194 = vpop.f32.mrf.mxu0
    %1195 = vmatprep.mubr.f32.mxu0 0.0
    %1196 = vmatmul.mubr.f32.gmra.mxu0 %v121
    %v1197 = vpop.f32.mrf.mxu0
    %v1198 = vadd.f32 %v1113, %v1197
    %v1199 = vpop.f32.mrf.mxu0
    %1200 = vmatprep.mubr.f32.mxu0 0.0
    %1201 = vmatmul.mubr.f32.gmra.mxu0 %v124
    %v1202 = vpop.f32.mrf.mxu0
    %v1203 = vadd.f32 %v1118, %v1202
    %v1204 = vpop.f32.mrf.mxu0
    %1205 = vmatprep.mubr.f32.mxu0 0.0
    %1206 = vmatmul.mubr.f32.gmra.mxu0 %v127
    %v1207 = vpop.f32.mrf.mxu0
    %v1208 = vadd.f32 %v1123, %v1207
    %v1209 = vpop.f32.mrf.mxu0
    %1210 = vdwg.mxu0
    %v1211 = vld [vmem:[#allocation2 + $0x238] sm:$0x1]
    %v1212 = vlaneseq
    %v1213 = vshrl.u32 %v1212, 7
    %v1214 = vsub.s32 0, %v1213
    %v1215 = vrot.slane %v1211, %v1214
    %v1216 = vmul.f32 %v447, %v1215
    %v1217 = vmul.f32 %v452, %v1215
    %v1218 = vmul.f32 %v457, %v1215
    %v1219 = vmul.f32 %v462, %v1215
    %v1220 = vadd.f32 %v1193, %v1216
    %v1221 = vadd.f32 %v1198, %v1217
    %v1222 = vadd.f32 %v1203, %v1218
    %v1223 = vadd.f32 %v1208, %v1219
    %v1224 = vld [vmem:[#allocation2 + $0x240] sm:$0x1]
    %v1225 = vlaneseq
    %v1226 = vshrl.u32 %v1225, 7
    %v1227 = vsub.s32 0, %v1226
    %v1228 = vrot.slane %v1224, %v1227
    %v1229 = vadd.f32 %v1220, %v1228
    %v1230 = vadd.f32 %v1221, %v1228
    %v1231 = vadd.f32 %v1222, %v1228
    %v1232 = vadd.f32 %v1223, %v1228
    %v1233 = vmax.f32 %v1229, 0.0
    %v1234 = vmax.f32 %v1230, 0.0
    %v1235 = vmax.f32 %v1231, 0.0
    %v1236 = vmax.f32 %v1232, 0.0
    %v1237 = vld [vmem:[#allocation2 + $0x248] sm:$0xff]
    %v1238 = vld [vmem:[#allocation2 + $0x250] sm:$0xff]
    %v1239 = vld [vmem:[#allocation2 + $0x258] sm:$0xff]
    %v1240 = vld [vmem:[#allocation2 + $0x260] sm:$0xff]
    %v1241 = vld [vmem:[#allocation2 + $0x268] sm:$0xff]
    %v1242 = vld [vmem:[#allocation2 + $0x270] sm:$0xff]
    %v1243 = vld [vmem:[#allocation2 + $0x278] sm:$0xff]
    %v1244 = vld [vmem:[#allocation2 + $0x280] sm:$0xff]
    %v1245 = vld [vmem:[#allocation2 + $0x288] sm:$0xff]
    %v1246 = vld [vmem:[#allocation2 + $0x290] sm:$0xff]
    %v1247 = vld [vmem:[#allocation2 + $0x298] sm:$0xff]
    %v1248 = vld [vmem:[#allocation2 + $0x2a0] sm:$0xff]
    %v1249 = vld [vmem:[#allocation2 + $0x2a8] sm:$0xff]
    %v1250 = vld [vmem:[#allocation2 + $0x2b0] sm:$0xff]
    %v1251 = vld [vmem:[#allocation2 + $0x2b8] sm:$0xff]
    %v1252 = vld [vmem:[#allocation2 + $0x2c0] sm:$0xff]
    %v1253 = vld [vmem:[#allocation2 + $0x2c8] sm:$0x1]
    %v1254 = vlaneseq
    %v1255 = vshrl.u32 %v1254, 7
    %v1256 = vsub.s32 0, %v1255
    %v1257 = vrot.slane %v1253, %v1256
    %1258 = vmatprep.subr.mxu0 0.0
    %1259 = vmatpush1.msra.mxu0 %v1252
    %1260 = vmatprep.subr.mxu0 0.0
    %1261 = vmatpush1.msra.mxu0 %v1251
    %1262 = vmatprep.subr.mxu0 0.0
    %1263 = vmatpush1.msra.mxu0 %v1250
    %1264 = vmatprep.subr.mxu0 0.0
    %1265 = vmatpush1.msra.mxu0 %v1249
    %1266 = vmatprep.subr.mxu0 0.0
    %1267 = vmatpush1.msra.mxu0 %v1248
    %1268 = vmatprep.subr.mxu0 0.0
    %1269 = vmatpush1.msra.mxu0 %v1247
    %1270 = vmatprep.subr.mxu0 0.0
    %1271 = vmatpush1.msra.mxu0 %v1246
    %1272 = vmatprep.subr.mxu0 0.0
    %1273 = vmatpush1.msra.mxu0 %v1245
    %1274 = vmatprep.subr.mxu0 0.0
    %1275 = vmatpush1.msra.mxu0 %v1244
    %1276 = vmatprep.subr.mxu0 0.0
    %1277 = vmatpush1.msra.mxu0 %v1243
    %1278 = vmatprep.subr.mxu0 0.0
    %1279 = vmatpush1.msra.mxu0 %v1242
    %1280 = vmatprep.subr.mxu0 0.0
    %1281 = vmatpush1.msra.mxu0 %v1241
    %1282 = vmatprep.subr.mxu0 0.0
    %1283 = vmatpush1.msra.mxu0 %v1240
    %1284 = vmatprep.subr.mxu0 0.0
    %1285 = vmatpush1.msra.mxu0 %v1239
    %1286 = vmatprep.subr.mxu0 0.0
    %1287 = vmatpush1.msra.mxu0 %v1238
    %1288 = vmatprep.subr.mxu0 0.0
    %1289 = vmatpush1.msra.mxu0 %v1237
    %1290 = vmatprep.subr.mxu0 0.0
    %1291 = vmatpush2.msra.mxu0 0.0
    %1292 = vmatprep.subr.mxu0 0.0
    %1293 = vmatpush2.msra.mxu0 0.0
    %1294 = vmatprep.subr.mxu0 0.0
    %1295 = vmatpush2.msra.mxu0 0.0
    %1296 = vmatprep.subr.mxu0 0.0
    %1297 = vmatpush2.msra.mxu0 0.0
    %1298 = vmatprep.subr.mxu0 0.0
    %1299 = vmatpush2.msra.mxu0 0.0
    %1300 = vmatprep.subr.mxu0 0.0
    %1301 = vmatpush2.msra.mxu0 0.0
    %1302 = vmatprep.subr.mxu0 0.0
    %1303 = vmatpush2.msra.mxu0 0.0
    %1304 = vmatprep.subr.mxu0 0.0
    %1305 = vmatpush2.msra.mxu0 0.0
    %1306 = vmatprep.subr.mxu0 0.0
    %1307 = vmatpush2.msra.mxu0 0.0
    %1308 = vmatprep.subr.mxu0 0.0
    %1309 = vmatpush2.msra.mxu0 0.0
    %1310 = vmatprep.subr.mxu0 0.0
    %1311 = vmatpush2.msra.mxu0 0.0
    %1312 = vmatprep.subr.mxu0 0.0
    %1313 = vmatpush2.msra.mxu0 0.0
    %1314 = vmatprep.subr.mxu0 0.0
    %1315 = vmatpush2.msra.mxu0 0.0
    %1316 = vmatprep.subr.mxu0 0.0
    %1317 = vmatpush2.msra.mxu0 0.0
    %1318 = vmatprep.subr.mxu0 0.0
    %1319 = vmatpush2.msra.mxu0 0.0
    %1320 = vmatprep.subr.mxu0 0.0
    %1321 = vmatpush2.msra.mxu0 0.0
    %1322 = vmatprep.mubr.f32.mxu0 0.0
    %1323 = vmatmul.mubr.f32.gmra.mxu0 %v1233
    %v1324 = vpop.f32.mrf.mxu0
    %v1325 = vadd.f32 %v1257, %v1324
    %v1326 = vpop.f32.mrf.mxu0
    %1327 = vmatprep.mubr.f32.mxu0 0.0
    %1328 = vmatmul.mubr.f32.gmra.mxu0 %v1234
    %v1329 = vpop.f32.mrf.mxu0
    %v1330 = vadd.f32 %v1257, %v1329
    %v1331 = vpop.f32.mrf.mxu0
    %1332 = vmatprep.mubr.f32.mxu0 0.0
    %1333 = vmatmul.mubr.f32.gmra.mxu0 %v1235
    %v1334 = vpop.f32.mrf.mxu0
    %v1335 = vadd.f32 %v1257, %v1334
    %v1336 = vpop.f32.mrf.mxu0
    %1337 = vmatprep.mubr.f32.mxu0 0.0
    %1338 = vmatmul.mubr.f32.gmra.mxu0 %v1236
    %v1339 = vpop.f32.mrf.mxu0
    %v1340 = vadd.f32 %v1257, %v1339
    %v1341 = vpop.f32.mrf.mxu0
    %1342 = vdwg.mxu0
    %1343 = vmatprep.subr.mxu0 0.0
    %1344 = vmatpush1.msra.mxu0 0.0
    %1345 = vmatprep.subr.mxu0 0.0
    %1346 = vmatpush1.msra.mxu0 0.0
    %1347 = vmatprep.subr.mxu0 0.0
    %1348 = vmatpush1.msra.mxu0 0.0
    %1349 = vmatprep.subr.mxu0 0.0
    %1350 = vmatpush1.msra.mxu0 0.0
    %1351 = vmatprep.subr.mxu0 0.0
    %1352 = vmatpush1.msra.mxu0 0.0
    %1353 = vmatprep.subr.mxu0 0.0
    %1354 = vmatpush1.msra.mxu0 0.0
    %1355 = vmatprep.subr.mxu0 0.0
    %1356 = vmatpush1.msra.mxu0 0.0
    %1357 = vmatprep.subr.mxu0 0.0
    %1358 = vmatpush1.msra.mxu0 0.0
    %1359 = vmatprep.subr.mxu0 0.0
    %1360 = vmatpush1.msra.mxu0 0.0
    %1361 = vmatprep.subr.mxu0 0.0
    %1362 = vmatpush1.msra.mxu0 0.0
    %1363 = vmatprep.subr.mxu0 0.0
    %1364 = vmatpush1.msra.mxu0 0.0
    %1365 = vmatprep.subr.mxu0 0.0
    %1366 = vmatpush1.msra.mxu0 0.0
    %1367 = vmatprep.subr.mxu0 0.0
    %1368 = vmatpush1.msra.mxu0 %v1340
    %1369 = vmatprep.subr.mxu0 0.0
    %1370 = vmatpush1.msra.mxu0 %v1335
    %1371 = vmatprep.subr.mxu0 0.0
    %1372 = vmatpush1.msra.mxu0 %v1330
    %1373 = vmatprep.subr.mxu0 0.0
    %1374 = vmatpush1.msra.mxu0 %v1325
    %1375 = vmatprep.subr.mxu0 0.0
    %1376 = vmatpush2.msra.mxu0 0.0
    %1377 = vmatprep.subr.mxu0 0.0
    %1378 = vmatpush2.msra.mxu0 0.0
    %1379 = vmatprep.subr.mxu0 0.0
    %1380 = vmatpush2.msra.mxu0 0.0
    %1381 = vmatprep.subr.mxu0 0.0
    %1382 = vmatpush2.msra.mxu0 0.0
    %1383 = vmatprep.subr.mxu0 0.0
    %1384 = vmatpush2.msra.mxu0 0.0
    %1385 = vmatprep.subr.mxu0 0.0
    %1386 = vmatpush2.msra.mxu0 0.0
    %1387 = vmatprep.subr.mxu0 0.0
    %1388 = vmatpush2.msra.mxu0 0.0
    %1389 = vmatprep.subr.mxu0 0.0
    %1390 = vmatpush2.msra.mxu0 0.0
    %1391 = vmatprep.subr.mxu0 0.0
    %1392 = vmatpush2.msra.mxu0 0.0
    %1393 = vmatprep.subr.mxu0 0.0
    %1394 = vmatpush2.msra.mxu0 0.0
    %1395 = vmatprep.subr.mxu0 0.0
    %1396 = vmatpush2.msra.mxu0 0.0
    %1397 = vmatprep.subr.mxu0 0.0
    %1398 = vmatpush2.msra.mxu0 0.0
    %1399 = vmatprep.subr.mxu0 0.0
    %1400 = vmatpush2.msra.mxu0 0.0
    %1401 = vmatprep.subr.mxu0 0.0
    %1402 = vmatpush2.msra.mxu0 0.0
    %1403 = vmatprep.subr.mxu0 0.0
    %1404 = vmatpush2.msra.mxu0 0.0
    %1405 = vmatprep.subr.mxu0 0.0
    %1406 = vmatpush2.msra.mxu0 0.0
    %1407 = vmatprep.mubr.f32.mxu0 0.0
    %1408 = vmatmul.mubr.f32.gmra.mxu0 %v597
    %v1409 = vpop.f32.mrf.mxu0
    %v1410 = vadd.f32 0.0, %v1409
    %v1411 = vpop.f32.mrf.mxu0
    %1412 = vmatprep.mubr.f32.mxu0 0.0
    %1413 = vmatmul.mubr.f32.gmra.mxu0 %v600
    %v1414 = vpop.f32.mrf.mxu0
    %v1415 = vadd.f32 0.0, %v1414
    %v1416 = vpop.f32.mrf.mxu0
    %1417 = vdwg.mxu0
    %v1418 = vld [vmem:[#allocation2 + $0x2d0] sm:$0xff]
    %v1419 = vld [vmem:[#allocation2 + $0x2d8] sm:$0xff]
    %v1420 = vld [vmem:[#allocation2 + $0x2e0] sm:$0xff]
    %v1421 = vld [vmem:[#allocation2 + $0x2e8] sm:$0xff]
    %v1422 = vld [vmem:[#allocation2 + $0x2f0] sm:$0xff]
    %v1423 = vld [vmem:[#allocation2 + $0x2f8] sm:$0xff]
    %v1424 = vld [vmem:[#allocation2 + $0x300] sm:$0xff]
    %v1425 = vld [vmem:[#allocation2 + $0x308] sm:$0xff]
    %v1426 = vld [vmem:[#allocation2 + $0x310] sm:$0xff]
    %v1427 = vld [vmem:[#allocation2 + $0x318] sm:$0xff]
    %v1428 = vld [vmem:[#allocation2 + $0x320] sm:$0xff]
    %v1429 = vld [vmem:[#allocation2 + $0x328] sm:$0xff]
    %v1430 = vld [vmem:[#allocation2 + $0x330] sm:$0xff]
    %v1431 = vld [vmem:[#allocation2 + $0x338] sm:$0xff]
    %v1432 = vld [vmem:[#allocation2 + $0x340] sm:$0xff]
    %v1433 = vld [vmem:[#allocation2 + $0x348] sm:$0xff]
    %v1434 = vld [vmem:[#allocation2 + $0x350] sm:$0xff]
    %v1435 = vld [vmem:[#allocation2 + $0x358] sm:$0xff]
    %v1436 = vld [vmem:[#allocation2 + $0x360] sm:$0xff]
    %v1437 = vld [vmem:[#allocation2 + $0x368] sm:$0xff]
    %v1438 = vld [vmem:[#allocation2 + $0x370] sm:$0xff]
    %v1439 = vld [vmem:[#allocation2 + $0x378] sm:$0xff]
    %v1440 = vld [vmem:[#allocation2 + $0x380] sm:$0xff]
    %v1441 = vld [vmem:[#allocation2 + $0x388] sm:$0xff]
    %v1442 = vld [vmem:[#allocation2 + $0x390] sm:$0xff]
    %v1443 = vld [vmem:[#allocation2 + $0x398] sm:$0xff]
    %v1444 = vld [vmem:[#allocation2 + $0x3a0] sm:$0xff]
    %v1445 = vld [vmem:[#allocation2 + $0x3a8] sm:$0xff]
    %v1446 = vld [vmem:[#allocation2 + $0x3b0] sm:$0xff]
    %v1447 = vld [vmem:[#allocation2 + $0x3b8] sm:$0xff]
    %v1448 = vld [vmem:[#allocation2 + $0x3c0] sm:$0xff]
    %v1449 = vld [vmem:[#allocation2 + $0x3c8] sm:$0xff]
    %1450 = vmatprep.subr.mxu0 0.0
    %1451 = vmatpush1.msra.mxu0 %v1449
    %1452 = vmatprep.subr.mxu0 0.0
    %1453 = vmatpush1.msra.mxu0 %v1448
    %1454 = vmatprep.subr.mxu0 0.0
    %1455 = vmatpush1.msra.mxu0 %v1447
    %1456 = vmatprep.subr.mxu0 0.0
    %1457 = vmatpush1.msra.mxu0 %v1446
    %1458 = vmatprep.subr.mxu0 0.0
    %1459 = vmatpush1.msra.mxu0 %v1445
    %1460 = vmatprep.subr.mxu0 0.0
    %1461 = vmatpush1.msra.mxu0 %v1444
    %1462 = vmatprep.subr.mxu0 0.0
    %1463 = vmatpush1.msra.mxu0 %v1443
    %1464 = vmatprep.subr.mxu0 0.0
    %1465 = vmatpush1.msra.mxu0 %v1442
    %1466 = vmatprep.subr.mxu0 0.0
    %1467 = vmatpush1.msra.mxu0 %v1441
    %1468 = vmatprep.subr.mxu0 0.0
    %1469 = vmatpush1.msra.mxu0 %v1440
    %1470 = vmatprep.subr.mxu0 0.0
    %1471 = vmatpush1.msra.mxu0 %v1439
    %1472 = vmatprep.subr.mxu0 0.0
    %1473 = vmatpush1.msra.mxu0 %v1438
    %1474 = vmatprep.subr.mxu0 0.0
    %1475 = vmatpush1.msra.mxu0 %v1437
    %1476 = vmatprep.subr.mxu0 0.0
    %1477 = vmatpush1.msra.mxu0 %v1436
    %1478 = vmatprep.subr.mxu0 0.0
    %1479 = vmatpush1.msra.mxu0 %v1435
    %1480 = vmatprep.subr.mxu0 0.0
    %1481 = vmatpush1.msra.mxu0 %v1434
    %1482 = vmatprep.subr.mxu0 0.0
    %1483 = vmatpush2.msra.mxu0 0.0
    %1484 = vmatprep.subr.mxu0 0.0
    %1485 = vmatpush2.msra.mxu0 0.0
    %1486 = vmatprep.subr.mxu0 0.0
    %1487 = vmatpush2.msra.mxu0 0.0
    %1488 = vmatprep.subr.mxu0 0.0
    %1489 = vmatpush2.msra.mxu0 0.0
    %1490 = vmatprep.subr.mxu0 0.0
    %1491 = vmatpush2.msra.mxu0 0.0
    %1492 = vmatprep.subr.mxu0 0.0
    %1493 = vmatpush2.msra.mxu0 0.0
    %1494 = vmatprep.subr.mxu0 0.0
    %1495 = vmatpush2.msra.mxu0 0.0
    %1496 = vmatprep.subr.mxu0 0.0
    %1497 = vmatpush2.msra.mxu0 0.0
    %1498 = vmatprep.subr.mxu0 0.0
    %1499 = vmatpush2.msra.mxu0 0.0
    %1500 = vmatprep.subr.mxu0 0.0
    %1501 = vmatpush2.msra.mxu0 0.0
    %1502 = vmatprep.subr.mxu0 0.0
    %1503 = vmatpush2.msra.mxu0 0.0
    %1504 = vmatprep.subr.mxu0 0.0
    %1505 = vmatpush2.msra.mxu0 0.0
    %1506 = vmatprep.subr.mxu0 0.0
    %1507 = vmatpush2.msra.mxu0 0.0
    %1508 = vmatprep.subr.mxu0 0.0
    %1509 = vmatpush2.msra.mxu0 0.0
    %1510 = vmatprep.subr.mxu0 0.0
    %1511 = vmatpush2.msra.mxu0 0.0
    %1512 = vmatprep.subr.mxu0 0.0
    %1513 = vmatpush2.msra.mxu0 0.0
    %1514 = vmatprep.mubr.f32.mxu0 0.0
    %1515 = vmatmul.mubr.f32.gmra.mxu0 %v1410
    %v1516 = vpop.f32.mrf.mxu0
    %v1517 = vadd.f32 0.0, %v1516
    %v1518 = vpop.f32.mrf.mxu0
    %1519 = vmatprep.mubr.f32.mxu0 0.0
    %1520 = vmatmul.mubr.f32.gmra.mxu0 %v1415
    %v1521 = vpop.f32.mrf.mxu0
    %v1522 = vadd.f32 0.0, %v1521
    %v1523 = vpop.f32.mrf.mxu0
    %1524 = vdwg.mxu0
    %1525 = vmatprep.subr.mxu0 0.0
    %1526 = vmatpush1.msra.mxu0 %v1433
    %1527 = vmatprep.subr.mxu0 0.0
    %1528 = vmatpush1.msra.mxu0 %v1432
    %1529 = vmatprep.subr.mxu0 0.0
    %1530 = vmatpush1.msra.mxu0 %v1431
    %1531 = vmatprep.subr.mxu0 0.0
    %1532 = vmatpush1.msra.mxu0 %v1430
    %1533 = vmatprep.subr.mxu0 0.0
    %1534 = vmatpush1.msra.mxu0 %v1429
    %1535 = vmatprep.subr.mxu0 0.0
    %1536 = vmatpush1.msra.mxu0 %v1428
    %1537 = vmatprep.subr.mxu0 0.0
    %1538 = vmatpush1.msra.mxu0 %v1427
    %1539 = vmatprep.subr.mxu0 0.0
    %1540 = vmatpush1.msra.mxu0 %v1426
    %1541 = vmatprep.subr.mxu0 0.0
    %1542 = vmatpush1.msra.mxu0 %v1425
    %1543 = vmatprep.subr.mxu0 0.0
    %1544 = vmatpush1.msra.mxu0 %v1424
    %1545 = vmatprep.subr.mxu0 0.0
    %1546 = vmatpush1.msra.mxu0 %v1423
    %1547 = vmatprep.subr.mxu0 0.0
    %1548 = vmatpush1.msra.mxu0 %v1422
    %1549 = vmatprep.subr.mxu0 0.0
    %1550 = vmatpush1.msra.mxu0 %v1421
    %1551 = vmatprep.subr.mxu0 0.0
    %1552 = vmatpush1.msra.mxu0 %v1420
    %1553 = vmatprep.subr.mxu0 0.0
    %1554 = vmatpush1.msra.mxu0 %v1419
    %1555 = vmatprep.subr.mxu0 0.0
    %1556 = vmatpush1.msra.mxu0 %v1418
    %1557 = vmatprep.subr.mxu0 0.0
    %1558 = vmatpush2.msra.mxu0 0.0
    %1559 = vmatprep.subr.mxu0 0.0
    %1560 = vmatpush2.msra.mxu0 0.0
    %1561 = vmatprep.subr.mxu0 0.0
    %1562 = vmatpush2.msra.mxu0 0.0
    %1563 = vmatprep.subr.mxu0 0.0
    %1564 = vmatpush2.msra.mxu0 0.0
    %1565 = vmatprep.subr.mxu0 0.0
    %1566 = vmatpush2.msra.mxu0 0.0
    %1567 = vmatprep.subr.mxu0 0.0
    %1568 = vmatpush2.msra.mxu0 0.0
    %1569 = vmatprep.subr.mxu0 0.0
    %1570 = vmatpush2.msra.mxu0 0.0
    %1571 = vmatprep.subr.mxu0 0.0
    %1572 = vmatpush2.msra.mxu0 0.0
    %1573 = vmatprep.subr.mxu0 0.0
    %1574 = vmatpush2.msra.mxu0 0.0
    %1575 = vmatprep.subr.mxu0 0.0
    %1576 = vmatpush2.msra.mxu0 0.0
    %1577 = vmatprep.subr.mxu0 0.0
    %1578 = vmatpush2.msra.mxu0 0.0
    %1579 = vmatprep.subr.mxu0 0.0
    %1580 = vmatpush2.msra.mxu0 0.0
    %1581 = vmatprep.subr.mxu0 0.0
    %1582 = vmatpush2.msra.mxu0 0.0
    %1583 = vmatprep.subr.mxu0 0.0
    %1584 = vmatpush2.msra.mxu0 0.0
    %1585 = vmatprep.subr.mxu0 0.0
    %1586 = vmatpush2.msra.mxu0 0.0
    %1587 = vmatprep.subr.mxu0 0.0
    %1588 = vmatpush2.msra.mxu0 0.0
    %1589 = vmatprep.mubr.f32.mxu0 0.0
    %1590 = vmatmul.mubr.f32.gmra.mxu0 %v857
    %v1591 = vpop.f32.mrf.mxu0
    %v1592 = vadd.f32 %v1517, %v1591
    %v1593 = vpop.f32.mrf.mxu0
    %1594 = vmatprep.mubr.f32.mxu0 0.0
    %1595 = vmatmul.mubr.f32.gmra.mxu0 %v858
    %v1596 = vpop.f32.mrf.mxu0
    %v1597 = vadd.f32 %v1522, %v1596
    %v1598 = vpop.f32.mrf.mxu0
    %1599 = vdwg.mxu0
    %v1600 = vld [vmem:[#allocation2 + $0x3d0] sm:$0x1]
    %v1601 = vlaneseq
    %v1602 = vshrl.u32 %v1601, 7
    %v1603 = vsub.s32 0, %v1602
    %v1604 = vrot.slane %v1600, %v1603
    %v1605 = vadd.f32 %v1592, %v1604
    %v1606 = vadd.f32 %v1597, %v1604
    %v1607 = vmax.f32 %v1605, 0.0
    %v1608 = vmax.f32 %v1606, 0.0
    %v1609 = vld [vmem:[%s2] sm:$0x1]
    %v1610 = vlaneseq
    %v1611 = vshrl.u32 %v1610, 7
    %v1612 = vsub.s32 0, %v1611
    %v1613 = vrot.slane %v1609, %v1612
    %vm1614 = vcmp.eq.s32.totalorder %v97, %v1613
    %v1615 = vsel %vm1614, 1, 0
    %v1616 = vcvt.s32.f32 %v1615
    %v1618 = vsel %vm116, %v1616, 0
    %1620 = vmatprep.subr.mxu0 0.0
    %1621 = vmatpush1.msra.mxu0 0.0
    %1622 = vmatprep.subr.mxu0 0.0
    %1623 = vmatpush1.msra.mxu0 0.0
    %1624 = vmatprep.subr.mxu0 0.0
    %1625 = vmatpush1.msra.mxu0 0.0
    %1626 = vmatprep.subr.mxu0 0.0
    %1627 = vmatpush1.msra.mxu0 0.0
    %1628 = vmatprep.subr.mxu0 0.0
    %1629 = vmatpush1.msra.mxu0 0.0
    %1630 = vmatprep.subr.mxu0 0.0
    %1631 = vmatpush1.msra.mxu0 0.0
    %1632 = vmatprep.subr.mxu0 0.0
    %1633 = vmatpush1.msra.mxu0 0.0
    %1634 = vmatprep.subr.mxu0 0.0
    %1635 = vmatpush1.msra.mxu0 0.0
    %1636 = vmatprep.subr.mxu0 0.0
    %1637 = vmatpush1.msra.mxu0 0.0
    %1638 = vmatprep.subr.mxu0 0.0
    %1639 = vmatpush1.msra.mxu0 0.0
    %1640 = vmatprep.subr.mxu0 0.0
    %1641 = vmatpush1.msra.mxu0 0.0
    %1642 = vmatprep.subr.mxu0 0.0
    %1643 = vmatpush1.msra.mxu0 0.0
    %1644 = vmatprep.subr.mxu0 0.0
    %1645 = vmatpush1.msra.mxu0 0.0
    %1646 = vmatprep.subr.mxu0 0.0
    %1647 = vmatpush1.msra.mxu0 0.0
    %1648 = vmatprep.subr.mxu0 0.0
    %1649 = vmatpush1.msra.mxu0 %v1608
    %1650 = vmatprep.subr.mxu0 0.0
    %1651 = vmatpush1.msra.mxu0 %v1607
    %1652 = vmatprep.subr.mxu0 0.0
    %1653 = vmatpush2.msra.mxu0 0.0
    %1654 = vmatprep.subr.mxu0 0.0
    %1655 = vmatpush2.msra.mxu0 0.0
    %1656 = vmatprep.subr.mxu0 0.0
    %1657 = vmatpush2.msra.mxu0 0.0
    %1658 = vmatprep.subr.mxu0 0.0
    %1659 = vmatpush2.msra.mxu0 0.0
    %1660 = vmatprep.subr.mxu0 0.0
    %1661 = vmatpush2.msra.mxu0 0.0
    %1662 = vmatprep.subr.mxu0 0.0
    %1663 = vmatpush2.msra.mxu0 0.0
    %1664 = vmatprep.subr.mxu0 0.0
    %1665 = vmatpush2.msra.mxu0 0.0
    %1666 = vmatprep.subr.mxu0 0.0
    %1667 = vmatpush2.msra.mxu0 0.0
    %1668 = vmatprep.subr.mxu0 0.0
    %1669 = vmatpush2.msra.mxu0 0.0
    %1670 = vmatprep.subr.mxu0 0.0
    %1671 = vmatpush2.msra.mxu0 0.0
    %1672 = vmatprep.subr.mxu0 0.0
    %1673 = vmatpush2.msra.mxu0 0.0
    %1674 = vmatprep.subr.mxu0 0.0
    %1675 = vmatpush2.msra.mxu0 0.0
    %1676 = vmatprep.subr.mxu0 0.0
    %1677 = vmatpush2.msra.mxu0 0.0
    %1678 = vmatprep.subr.mxu0 0.0
    %1679 = vmatpush2.msra.mxu0 0.0
    %1680 = vmatprep.subr.mxu0 0.0
    %1681 = vmatpush2.msra.mxu0 0.0
    %1682 = vmatprep.subr.mxu0 0.0
    %1683 = vmatpush2.msra.mxu0 0.0
    %1684 = vmatprep.mubr.f32.mxu0 0.0
    %1685 = vmatmul.mubr.f32.gmra.mxu0 %v1618
    %v1686 = vpop.f32.mrf.mxu0
    %v1687 = vadd.f32 0.0, %v1686
    %v1688 = vpop.f32.mrf.mxu0
    %1689 = vdwg.mxu0
    %v1690 = vld [vmem:[#allocation2 + $0x3d8] sm:$0xff]
    %v1691 = vld [vmem:[#allocation2 + $0x3e0] sm:$0xff]
    %v1692 = vld [vmem:[#allocation2 + $0x3e8] sm:$0xff]
    %v1693 = vld [vmem:[#allocation2 + $0x3f0] sm:$0xff]
    %v1694 = vld [vmem:[#allocation2 + $0x3f8] sm:$0xff]
    %v1695 = vld [vmem:[#allocation2 + $0x400] sm:$0xff]
    %v1696 = vld [vmem:[#allocation2 + $0x408] sm:$0xff]
    %v1697 = vld [vmem:[#allocation2 + $0x410] sm:$0xff]
    %v1698 = vld [vmem:[#allocation2 + $0x418] sm:$0xff]
    %v1699 = vld [vmem:[#allocation2 + $0x420] sm:$0xff]
    %v1700 = vld [vmem:[#allocation2 + $0x428] sm:$0xff]
    %v1701 = vld [vmem:[#allocation2 + $0x430] sm:$0xff]
    %v1702 = vld [vmem:[#allocation2 + $0x438] sm:$0xff]
    %v1703 = vld [vmem:[#allocation2 + $0x440] sm:$0xff]
    %v1704 = vld [vmem:[#allocation2 + $0x448] sm:$0xff]
    %v1705 = vld [vmem:[#allocation2 + $0x450] sm:$0xff]
    %v1706 = vld [vmem:[#allocation2 + $0x458] sm:$0x1]
    %v1707 = vlaneseq
    %v1708 = vshrl.u32 %v1707, 7
    %v1709 = vsub.s32 0, %v1708
    %v1710 = vrot.slane %v1706, %v1709
    %1711 = vmatprep.subr.mxu0 0.0
    %1712 = vmatpush1.msra.mxu0 %v1705
    %1713 = vmatprep.subr.mxu0 0.0
    %1714 = vmatpush1.msra.mxu0 %v1704
    %1715 = vmatprep.subr.mxu0 0.0
    %1716 = vmatpush1.msra.mxu0 %v1703
    %1717 = vmatprep.subr.mxu0 0.0
    %1718 = vmatpush1.msra.mxu0 %v1702
    %1719 = vmatprep.subr.mxu0 0.0
    %1720 = vmatpush1.msra.mxu0 %v1701
    %1721 = vmatprep.subr.mxu0 0.0
    %1722 = vmatpush1.msra.mxu0 %v1700
    %1723 = vmatprep.subr.mxu0 0.0
    %1724 = vmatpush1.msra.mxu0 %v1699
    %1725 = vmatprep.subr.mxu0 0.0
    %1726 = vmatpush1.msra.mxu0 %v1698
    %1727 = vmatprep.subr.mxu0 0.0
    %1728 = vmatpush1.msra.mxu0 %v1697
    %1729 = vmatprep.subr.mxu0 0.0
    %1730 = vmatpush1.msra.mxu0 %v1696
    %1731 = vmatprep.subr.mxu0 0.0
    %1732 = vmatpush1.msra.mxu0 %v1695
    %1733 = vmatprep.subr.mxu0 0.0
    %1734 = vmatpush1.msra.mxu0 %v1694
    %1735 = vmatprep.subr.mxu0 0.0
    %1736 = vmatpush1.msra.mxu0 %v1693
    %1737 = vmatprep.subr.mxu0 0.0
    %1738 = vmatpush1.msra.mxu0 %v1692
    %1739 = vmatprep.subr.mxu0 0.0
    %1740 = vmatpush1.msra.mxu0 %v1691
    %1741 = vmatprep.subr.mxu0 0.0
    %1742 = vmatpush1.msra.mxu0 %v1690
    %1743 = vmatprep.subr.mxu0 0.0
    %1744 = vmatpush2.msra.mxu0 0.0
    %1745 = vmatprep.subr.mxu0 0.0
    %1746 = vmatpush2.msra.mxu0 0.0
    %1747 = vmatprep.subr.mxu0 0.0
    %1748 = vmatpush2.msra.mxu0 0.0
    %1749 = vmatprep.subr.mxu0 0.0
    %1750 = vmatpush2.msra.mxu0 0.0
    %1751 = vmatprep.subr.mxu0 0.0
    %1752 = vmatpush2.msra.mxu0 0.0
    %1753 = vmatprep.subr.mxu0 0.0
    %1754 = vmatpush2.msra.mxu0 0.0
    %1755 = vmatprep.subr.mxu0 0.0
    %1756 = vmatpush2.msra.mxu0 0.0
    %1757 = vmatprep.subr.mxu0 0.0
    %1758 = vmatpush2.msra.mxu0 0.0
    %1759 = vmatprep.subr.mxu0 0.0
    %1760 = vmatpush2.msra.mxu0 0.0
    %1761 = vmatprep.subr.mxu0 0.0
    %1762 = vmatpush2.msra.mxu0 0.0
    %1763 = vmatprep.subr.mxu0 0.0
    %1764 = vmatpush2.msra.mxu0 0.0
    %1765 = vmatprep.subr.mxu0 0.0
    %1766 = vmatpush2.msra.mxu0 0.0
    %1767 = vmatprep.subr.mxu0 0.0
    %1768 = vmatpush2.msra.mxu0 0.0
    %1769 = vmatprep.subr.mxu0 0.0
    %1770 = vmatpush2.msra.mxu0 0.0
    %1771 = vmatprep.subr.mxu0 0.0
    %1772 = vmatpush2.msra.mxu0 0.0
    %1773 = vmatprep.subr.mxu0 0.0
    %1774 = vmatpush2.msra.mxu0 0.0
    %1775 = vmatprep.mubr.f32.mxu0 0.0
    %1776 = vmatmul.mubr.f32.gmra.mxu0 %v1687
    %v1777 = vpop.f32.mrf.mxu0
    %v1778 = vadd.f32 %v1710, %v1777
    %v1779 = vpop.f32.mrf.mxu0
    %1780 = vdwg.mxu0
    %v1781 = vmax.f32 %v1778, 0.0
    %v1782 = vld [vmem:[#allocation2 + $0x460] sm:$0xff]
    %v1783 = vld [vmem:[#allocation2 + $0x468] sm:$0xff]
    %v1784 = vld [vmem:[#allocation2 + $0x470] sm:$0xff]
    %v1785 = vld [vmem:[#allocation2 + $0x478] sm:$0xff]
    %v1786 = vld [vmem:[#allocation2 + $0x480] sm:$0xff]
    %v1787 = vld [vmem:[#allocation2 + $0x488] sm:$0xff]
    %v1788 = vld [vmem:[#allocation2 + $0x490] sm:$0xff]
    %v1789 = vld [vmem:[#allocation2 + $0x498] sm:$0xff]
    %v1790 = vld [vmem:[#allocation2 + $0x4a0] sm:$0xff]
    %v1791 = vld [vmem:[#allocation2 + $0x4a8] sm:$0xff]
    %v1792 = vld [vmem:[#allocation2 + $0x4b0] sm:$0xff]
    %v1793 = vld [vmem:[#allocation2 + $0x4b8] sm:$0xff]
    %v1794 = vld [vmem:[#allocation2 + $0x4c0] sm:$0xff]
    %v1795 = vld [vmem:[#allocation2 + $0x4c8] sm:$0xff]
    %v1796 = vld [vmem:[#allocation2 + $0x4d0] sm:$0xff]
    %v1797 = vld [vmem:[#allocation2 + $0x4d8] sm:$0xff]
    %v1798 = vld [vmem:[#allocation2 + $0x4e0] sm:$0x1]
    %v1799 = vlaneseq
    %v1800 = vshrl.u32 %v1799, 7
    %v1801 = vsub.s32 0, %v1800
    %v1802 = vrot.slane %v1798, %v1801
    %1803 = vmatprep.subr.mxu0 0.0
    %1804 = vmatpush1.msra.mxu0 %v1797
    %1805 = vmatprep.subr.mxu0 0.0
    %1806 = vmatpush1.msra.mxu0 %v1796
    %1807 = vmatprep.subr.mxu0 0.0
    %1808 = vmatpush1.msra.mxu0 %v1795
    %1809 = vmatprep.subr.mxu0 0.0
    %1810 = vmatpush1.msra.mxu0 %v1794
    %1811 = vmatprep.subr.mxu0 0.0
    %1812 = vmatpush1.msra.mxu0 %v1793
    %1813 = vmatprep.subr.mxu0 0.0
    %1814 = vmatpush1.msra.mxu0 %v1792
    %1815 = vmatprep.subr.mxu0 0.0
    %1816 = vmatpush1.msra.mxu0 %v1791
    %1817 = vmatprep.subr.mxu0 0.0
    %1818 = vmatpush1.msra.mxu0 %v1790
    %1819 = vmatprep.subr.mxu0 0.0
    %1820 = vmatpush1.msra.mxu0 %v1789
    %1821 = vmatprep.subr.mxu0 0.0
    %1822 = vmatpush1.msra.mxu0 %v1788
    %1823 = vmatprep.subr.mxu0 0.0
    %1824 = vmatpush1.msra.mxu0 %v1787
    %1825 = vmatprep.subr.mxu0 0.0
    %1826 = vmatpush1.msra.mxu0 %v1786
    %1827 = vmatprep.subr.mxu0 0.0
    %1828 = vmatpush1.msra.mxu0 %v1785
    %1829 = vmatprep.subr.mxu0 0.0
    %1830 = vmatpush1.msra.mxu0 %v1784
    %1831 = vmatprep.subr.mxu0 0.0
    %1832 = vmatpush1.msra.mxu0 %v1783
    %1833 = vmatprep.subr.mxu0 0.0
    %1834 = vmatpush1.msra.mxu0 %v1782
    %1835 = vmatprep.subr.mxu0 0.0
    %1836 = vmatpush2.msra.mxu0 0.0
    %1837 = vmatprep.subr.mxu0 0.0
    %1838 = vmatpush2.msra.mxu0 0.0
    %1839 = vmatprep.subr.mxu0 0.0
    %1840 = vmatpush2.msra.mxu0 0.0
    %1841 = vmatprep.subr.mxu0 0.0
    %1842 = vmatpush2.msra.mxu0 0.0
    %1843 = vmatprep.subr.mxu0 0.0
    %1844 = vmatpush2.msra.mxu0 0.0
    %1845 = vmatprep.subr.mxu0 0.0
    %1846 = vmatpush2.msra.mxu0 0.0
    %1847 = vmatprep.subr.mxu0 0.0
    %1848 = vmatpush2.msra.mxu0 0.0
    %1849 = vmatprep.subr.mxu0 0.0
    %1850 = vmatpush2.msra.mxu0 0.0
    %1851 = vmatprep.subr.mxu0 0.0
    %1852 = vmatpush2.msra.mxu0 0.0
    %1853 = vmatprep.subr.mxu0 0.0
    %1854 = vmatpush2.msra.mxu0 0.0
    %1855 = vmatprep.subr.mxu0 0.0
    %1856 = vmatpush2.msra.mxu0 0.0
    %1857 = vmatprep.subr.mxu0 0.0
    %1858 = vmatpush2.msra.mxu0 0.0
    %1859 = vmatprep.subr.mxu0 0.0
    %1860 = vmatpush2.msra.mxu0 0.0
    %1861 = vmatprep.subr.mxu0 0.0
    %1862 = vmatpush2.msra.mxu0 0.0
    %1863 = vmatprep.subr.mxu0 0.0
    %1864 = vmatpush2.msra.mxu0 0.0
    %1865 = vmatprep.subr.mxu0 0.0
    %1866 = vmatpush2.msra.mxu0 0.0
    %1867 = vmatprep.mubr.f32.mxu0 0.0
    %1868 = vmatmul.mubr.f32.gmra.mxu0 %v1781
    %v1869 = vpop.f32.mrf.mxu0
    %v1870 = vadd.f32 %v1802, %v1869
    %v1871 = vpop.f32.mrf.mxu0
    %1872 = vdwg.mxu0
    %1873 = vst [vmem:[#allocation5] sm:$0xff] %v1870
    // Predicated region
    $region30: #{tpu_custom_call.1} parent=1 // pred_check
      _
    $region31: #{tpu_custom_call.1} parent=1 // pred_check_branch
      %1875 = sbr.rel (0) target = $region33
    $region32: #{tpu_custom_call.1} parent=1 // pred_region
      %s1877 = ssub.s32 128, 128
      %1878 = vsyncadd [#allocation4], %s1877
      %s1880 = sshll.u32 [#allocation5], 4
      %s1881 = int_to_ptr.vmem [resolvable:$true] %s1880
      %1883 = dma.vmem_to_hbm [thread:$0]  %s1881, 128, %s6, [#allocation4]
    $region33: #{tpu_custom_call.1} parent=1 // pred_fallthru
      _
    // Predicated region
    $region34: #{tpu_custom_call.1} parent=1 // pred_check
      _
    $region35: #{tpu_custom_call.1} parent=1 // pred_check_branch
      %1885 = sbr.rel (0) target = $region37
    $region36: #{tpu_custom_call.1} parent=1 // pred_region
      %1886 = dma.done [#allocation4], 128
    $region37: #{tpu_custom_call.1} parent=1 // pred_fallthru
      _
    %1887 = vsyncpa [#allocation3], 1
    %1888 = vsyncpa [#allocation4], 1

</llo_original>
